<compile_context>
chip_gen: v5e
topology: v5e:2x2
jax: 0.10.0
libtpu: 0.0.40
codegen_flags: <defaults>
</compile_context>

<pallas_src>
import functools

import numpy as np

import jax
import jax.numpy as jnp
from jax.experimental import pallas as pl
from jax.experimental.pallas import tpu as pltpu


# ----------------------------------------------------------------------------
# Wrapper-side glue (runs in XLA / numpy at trace time, tiny).
# ----------------------------------------------------------------------------
def _extract_patches_nhwc(x, kh, kw, stride, pad):
    """x: (N, H, W, C) -> patches (N, Ho, Wo, kh*kw*C) with [kh, kw, cin] order."""
    x = jnp.pad(x, ((0, 0), (pad, pad), (pad, pad), (0, 0)))
    n, h, w, c = x.shape
    ho = (h - kh) // stride + 1
    wo = (w - kw) // stride + 1
    pieces = []
    for i in range(kh):
        for j in range(kw):
            pieces.append(
                x[:, i:i + stride * ho:stride, j:j + stride * wo:stride, :])
    p = jnp.stack(pieces, axis=3)                      # (N, Ho, Wo, kh*kw, C)
    return p.reshape(n, ho, wo, kh * kw * c), ho, wo


def _build_selection_stacked(hin, win, hout, wout, n, k, s, pad):
    """Tap-major stacked 0/1 gather matrix S of shape (k*k*M_out, M_in).

    Row r = t*M_out + m (t = i*k + j, m = (b*hout + ho)*wout + wo) is one-hot
    over input rows m_in = (b*hin + h)*win + w with h = s*ho + i - pad and
    w = s*wo + j - pad; it is all-zero when (h, w) lies in the padding border.
    Built fully vectorized (no Python triple loops).
    """
    m_in = n * hin * win
    m_out = n * hout * wout
    i_idx = np.arange(k)[:, None, None, None, None]
    j_idx = np.arange(k)[None, :, None, None, None]
    b_idx = np.arange(n)[None, None, :, None, None]
    ho_idx = np.arange(hout)[None, None, None, :, None]
    wo_idx = np.arange(wout)[None, None, None, None, :]

    h = s * ho_idx + i_idx - pad                       # (k,1,1,hout,1)
    w = s * wo_idx + j_idx - pad                       # (1,k,1,1,wout)
    valid = (h >= 0) & (h < hin) & (w >= 0) & (w < win)
    hc = np.clip(h, 0, hin - 1)
    wc = np.clip(w, 0, win - 1)
    col = (b_idx * hin + hc) * win + wc                # (k,k,n,hout,wout)

    shape = (k, k, n, hout, wout)
    rows = np.arange(k * k * m_out).reshape(shape)     # == t*m_out + m
    valid = np.broadcast_to(valid, shape)
    col = np.broadcast_to(col, shape)

    sel = np.zeros((k * k * m_out, m_in), np.float32)
    sel[rows[valid], col[valid]] = 1.0
    return sel


def _full_spec(shape):
    nd = len(shape)
    return pl.BlockSpec(shape, lambda i, _nd=nd: (0,) * _nd)


# ----------------------------------------------------------------------------
# Fused Pallas kernel: the whole SGREmbedding forward in one invocation.
# ----------------------------------------------------------------------------
def _make_fused_kernel(cfgs):
    num_layers = len(cfgs)

    def kernel(*refs):
        p1_ref = refs[0]
        w_refs = refs[1:1 + num_layers]
        b_ref = refs[1 + num_layers]
        s_refs = refs[2 + num_layers:2 + num_layers + (num_layers - 1)]
        o_ref = refs[-1]

        b_all = b_ref[...]                                 # (L, Cout)

        # Layer 1: wrapper-built im2col patches -> one wide MXU GEMM.
        act = jnp.dot(p1_ref[...], w_refs[0][...],
                      preferred_element_type=jnp.float32)
        act = jnp.maximum(act + b_all[0:1, :], 0.0)        # (M1, Cout)

        # Layers 2..L: activations never leave VMEM. Two GEMMs per layer.
        for l in range(1, num_layers):
            cfg = cfgs[l]
            taps, cin, cout, m_out = cfg["taps"], cfg["cin"], cfg["cout"], cfg["m"]

            # Gather GEMM: stacked 0/1 selection (taps*M_out, M_in) pulls every
            # (tap, output-row) activation row at once; zero rows = padding.
            rows = jnp.dot(s_refs[l - 1][...], act,
                           preferred_element_type=jnp.float32)   # (taps*M, Cin)

            # Rearrange tap-major row blocks into im2col columns (M, taps*Cin):
            # static sublane-aligned slices + one lane concat (pure VMEM relayout).
            patch = jnp.concatenate(
                [rows[t * m_out:(t + 1) * m_out, :] for t in range(taps)],
                axis=1)

            # Weight GEMM + bias + ReLU.
            act = jnp.dot(patch, w_refs[l][...],
                          preferred_element_type=jnp.float32)
            act = jnp.maximum(act + b_all[l:l + 1, :], 0.0)

        o_ref[...] = act.astype(o_ref.dtype)

    return kernel


# ----------------------------------------------------------------------------
# SGREmbedding: parameter construction + forward.
# ----------------------------------------------------------------------------
def init_sgr_embedding_params(key, in_channels, out_channels, num_layers=4,
                              kernel_size=4, dtype=jnp.float32):
    """Deterministic synthetic parameters matching the PyTorch module shapes."""
    layer_defs = [(in_channels, out_channels, kernel_size)]
    for _ in range(num_layers - 2):
        layer_defs.append((out_channels, out_channels, kernel_size))
    layer_defs.append((out_channels, out_channels, 3))   # final: k=3, s=1, p=1

    params = []
    for (cin, cout, k) in layer_defs:
        key, wk, bk = jax.random.split(key, 3)
        fan_in = cin * k * k
        scale = 1.0 / jnp.sqrt(jnp.asarray(fan_in, dtype))
        w = jax.random.uniform(wk, (cout, cin, k, k), dtype, -scale, scale)
        b = jax.random.uniform(bk, (cout,), dtype, -scale, scale)
        params.append({"w": w, "b": b})
    return params


def sgr_embedding_forward(params, x_nchw, kernel_size=4, stride=2, padding=1):
    """Forward pass of SGREmbedding. x: (N, C, H, W) -> (N, Cout, H', W')."""
    n, _, h, w = x_nchw.shape
    num_layers = len(params)

    # Static per-layer geometry.
    cfgs = []
    hin, win = h, w
    for idx, p in enumerate(params):
        cout, cin, kh, _ = p["w"].shape
        s, pad = (stride, padding) if idx < num_layers - 1 else (1, 1)
        hout = (hin + 2 * pad - kh) // s + 1
        wout = (win + 2 * pad - kh) // s + 1
        cfgs.append(dict(cin=cin, cout=cout, k=kh, s=s, pad=pad,
                         hin=hin, win=win, hout=hout, wout=wout,
                         m=n * hout * wout, m_in=n * hin * win, taps=kh * kh))
        hin, win = hout, wout

    # Layer-1 im2col patch matrix (tiny; one HBM read by the kernel).
    x_nhwc = jnp.transpose(x_nchw, (0, 2, 3, 1))
    c0 = cfgs[0]
    patches1, _, _ = _extract_patches_nhwc(x_nhwc, c0["k"], c0["k"],
                                           c0["s"], c0["pad"])
    p1 = patches1.reshape(c0["m"], c0["taps"] * c0["cin"]).astype(jnp.float32)

    # 2-D weights (K, Cout) with (kh, kw, cin) row order; stacked biases.
    w2ds, biases = [], []
    for p, cfg in zip(params, cfgs):
        k, cin, cout = cfg["k"], cfg["cin"], cfg["cout"]
        w2d = jnp.transpose(p["w"], (2, 3, 1, 0)).reshape(k * k * cin, cout)
        w2ds.append(w2d.astype(jnp.float32))
        biases.append(p["b"].astype(jnp.float32))
    b_stack = jnp.stack(biases, axis=0)                    # (L, Cout)

    # Constant stacked row-selection matrices for layers 2..L.
    sels = [jnp.asarray(_build_selection_stacked(cfg["hin"], cfg["win"],
                                                 cfg["hout"], cfg["wout"],
                                                 n, cfg["k"], cfg["s"],
                                                 cfg["pad"]))
            for cfg in cfgs[1:]]

    inputs = [p1] + w2ds + [b_stack] + sels
    out_m, out_c = cfgs[-1]["m"], cfgs[-1]["cout"]

    # Advisory cost estimate (layer-1 GEMM + per-layer gather & weight GEMMs).
    flops = 2 * cfgs[0]["m"] * (cfgs[0]["taps"] * cfgs[0]["cin"]) * cfgs[0]["cout"]
    for cfg in cfgs[1:]:
        flops += 2 * (cfg["taps"] * cfg["m"]) * cfg["m_in"] * cfg["cin"]
        flops += 2 * cfg["m"] * (cfg["taps"] * cfg["cin"]) * cfg["cout"]
    bytes_accessed = sum(int(a.size) * a.dtype.itemsize for a in inputs)
    bytes_accessed += out_m * out_c * 4

    out2d = pl.pallas_call(
        _make_fused_kernel(cfgs),
        out_shape=jax.ShapeDtypeStruct((out_m, out_c), jnp.float32),
        grid=(1,),
        in_specs=[_full_spec(a.shape) for a in inputs],
        out_specs=_full_spec((out_m, out_c)),
        compiler_params=pltpu.CompilerParams(
            dimension_semantics=("arbitrary",)),
        cost_estimate=pl.CostEstimate(flops=int(flops), transcendentals=0,
                                      bytes_accessed=int(bytes_accessed)),
    )(*inputs)

    out = out2d.reshape(n, cfgs[-1]["hout"], cfgs[-1]["wout"], out_c)
    return jnp.transpose(out, (0, 3, 1, 2))                # NHWC -> NCHW


# ----------------------------------------------------------------------------
# Plain-JAX reference (for numerical validation only).
# ----------------------------------------------------------------------------
def _reference_forward(params, x, stride=2, padding=1):
    out = x
    num = len(params)
    for idx, p in enumerate(params):
        s, pad = (stride, padding) if idx < num - 1 else (1, 1)
        out = jax.lax.conv_general_dilated(
            out, p["w"], window_strides=(s, s),
            padding=[(pad, pad), (pad, pad)],
            dimension_numbers=("NCHW", "OIHW", "NCHW"),
            precision=jax.lax.Precision.HIGHEST)
        out = jnp.maximum(out + p["b"].reshape(1, -1, 1, 1), 0.0)
    return out


if __name__ == "__main__":
    key = jax.random.PRNGKey(0)
    key, xk, pk = jax.random.split(key, 3)

    batch, in_channels, out_channels, spatial = 2, 4, 32, 16
    num_layers = 4

    x = jax.random.normal(xk, (batch, in_channels, spatial, spatial),
                          dtype=jnp.float32)
    params = init_sgr_embedding_params(pk, in_channels, out_channels,
                                       num_layers=num_layers, kernel_size=4)

    fwd = jax.jit(functools.partial(sgr_embedding_forward, params))
    out = fwd(x)
    jax.block_until_ready(out)

    # 16 -> 8 -> 4 -> 2 (three stride-2 convs) -> 2 (final stride-1 conv)
    assert out.shape == (batch, out_channels, 2, 2), out.shape
    assert bool(jnp.all(out >= 0.0))  # ReLU output is non-negative

    # Numerical check against the plain-JAX/XLA conv stack.
    ref = _reference_forward(params, x)
    err = float(jnp.max(jnp.abs(out - ref)))
    assert np.allclose(np.asarray(out), np.asarray(ref),
                       atol=5e-3, rtol=5e-3), err

    print("KERNEL_OK")
</pallas_src>

<mosaic_0001>
module attributes {stable_mosaic.version = 11 : i64} {
  func.func @kernel(%arg0: i32, %arg1: memref<128x64xf32, #tpu.memory_space<vmem>>, %arg2: memref<64x32xf32, #tpu.memory_space<vmem>>, %arg3: memref<512x32xf32, #tpu.memory_space<vmem>>, %arg4: memref<512x32xf32, #tpu.memory_space<vmem>>, %arg5: memref<288x32xf32, #tpu.memory_space<vmem>>, %arg6: memref<4x32xf32, #tpu.memory_space<vmem>>, %arg7: memref<512x128xf32, #tpu.memory_space<vmem>>, %arg8: memref<128x32xf32, #tpu.memory_space<vmem>>, %arg9: memref<72x8xf32, #tpu.memory_space<vmem>>, %arg10: memref<8x32xf32, #tpu.memory_space<vmem>>) attributes {dimension_semantics = [#tpu.dimension_semantics<arbitrary>], iteration_bounds = array<i64: 1>, scalar_prefetch = 0 : i64, scratch_operands = 0 : i64, tpu.core_type = #tpu.core_type<tc>, window_params = [{pipeline_mode = #tpu.pipeline_mode<synchronous>, transform_indices = @transform_0, window_bounds = array<i64: 128, 64>}, {pipeline_mode = #tpu.pipeline_mode<synchronous>, transform_indices = @transform_1, window_bounds = array<i64: 64, 32>}, {pipeline_mode = #tpu.pipeline_mode<synchronous>, transform_indices = @transform_2, window_bounds = array<i64: 512, 32>}, {pipeline_mode = #tpu.pipeline_mode<synchronous>, transform_indices = @transform_3, window_bounds = array<i64: 512, 32>}, {pipeline_mode = #tpu.pipeline_mode<synchronous>, transform_indices = @transform_4, window_bounds = array<i64: 288, 32>}, {pipeline_mode = #tpu.pipeline_mode<synchronous>, transform_indices = @transform_5, window_bounds = array<i64: 4, 32>}, {pipeline_mode = #tpu.pipeline_mode<synchronous>, transform_indices = @transform_6, window_bounds = array<i64: 512, 128>}, {pipeline_mode = #tpu.pipeline_mode<synchronous>, transform_indices = @transform_7, window_bounds = array<i64: 128, 32>}, {pipeline_mode = #tpu.pipeline_mode<synchronous>, transform_indices = @transform_8, window_bounds = array<i64: 72, 8>}, {pipeline_mode = #tpu.pipeline_mode<synchronous>, transform_indices = @transform_9, window_bounds = array<i64: 8, 32>}]} {
    %c0 = arith.constant 0 : index
    %c0_0 = arith.constant 0 : index
    %0 = vector.load %arg6[%c0, %c0_0] : memref<4x32xf32, #tpu.memory_space<vmem>>, vector<4x32xf32>
    %c0_1 = arith.constant 0 : index
    %c0_2 = arith.constant 0 : index
    %1 = vector.load %arg1[%c0_1, %c0_2] : memref<128x64xf32, #tpu.memory_space<vmem>>, vector<128x64xf32>
    %c0_3 = arith.constant 0 : index
    %c0_4 = arith.constant 0 : index
    %2 = vector.load %arg2[%c0_3, %c0_4] : memref<64x32xf32, #tpu.memory_space<vmem>>, vector<64x32xf32>
    %cst = arith.constant dense<0.000000e+00> : vector<128x32xf32>
    %3 = tpu.matmul %1, %2, %cst {dimension_numbers = #tpu.dot_dimension_numbers<[1], [0], [0], [1], [0, 0, 1, 1], [], []>} : vector<128x64xf32>, vector<64x32xf32>, vector<128x32xf32> -> vector<128x32xf32>
    %4 = vector.extract_strided_slice %0 {offsets = [0, 0], sizes = [1, 32], strides = [1, 1]} : vector<4x32xf32> to vector<1x32xf32>
    %5 = vector.broadcast %4 : vector<1x32xf32> to vector<128x32xf32>
    %6 = arith.addf %3, %5 : vector<128x32xf32>
    %cst_5 = arith.constant 0.000000e+00 : f32
    %7 = vector.broadcast %cst_5 : f32 to vector<128x32xf32>
    %8 = arith.maximumf %6, %7 : vector<128x32xf32>
    %c0_6 = arith.constant 0 : index
    %c0_7 = arith.constant 0 : index
    %9 = vector.load %arg7[%c0_6, %c0_7] : memref<512x128xf32, #tpu.memory_space<vmem>>, vector<512x128xf32>
    %cst_8 = arith.constant dense<0.000000e+00> : vector<512x32xf32>
    %10 = tpu.matmul %9, %8, %cst_8 {dimension_numbers = #tpu.dot_dimension_numbers<[1], [0], [0], [1], [0, 0, 1, 1], [], []>} : vector<512x128xf32>, vector<128x32xf32>, vector<512x32xf32> -> vector<512x32xf32>
    %11 = vector.extract_strided_slice %10 {offsets = [0, 0], sizes = [32, 32], strides = [1, 1]} : vector<512x32xf32> to vector<32x32xf32>
    %12 = vector.extract_strided_slice %10 {offsets = [32, 0], sizes = [32, 32], strides = [1, 1]} : vector<512x32xf32> to vector<32x32xf32>
    %13 = vector.extract_strided_slice %10 {offsets = [64, 0], sizes = [32, 32], strides = [1, 1]} : vector<512x32xf32> to vector<32x32xf32>
    %14 = vector.extract_strided_slice %10 {offsets = [96, 0], sizes = [32, 32], strides = [1, 1]} : vector<512x32xf32> to vector<32x32xf32>
    %15 = vector.extract_strided_slice %10 {offsets = [128, 0], sizes = [32, 32], strides = [1, 1]} : vector<512x32xf32> to vector<32x32xf32>
    %16 = vector.extract_strided_slice %10 {offsets = [160, 0], sizes = [32, 32], strides = [1, 1]} : vector<512x32xf32> to vector<32x32xf32>
    %17 = vector.extract_strided_slice %10 {offsets = [192, 0], sizes = [32, 32], strides = [1, 1]} : vector<512x32xf32> to vector<32x32xf32>
    %18 = vector.extract_strided_slice %10 {offsets = [224, 0], sizes = [32, 32], strides = [1, 1]} : vector<512x32xf32> to vector<32x32xf32>
    %19 = vector.extract_strided_slice %10 {offsets = [256, 0], sizes = [32, 32], strides = [1, 1]} : vector<512x32xf32> to vector<32x32xf32>
    %20 = vector.extract_strided_slice %10 {offsets = [288, 0], sizes = [32, 32], strides = [1, 1]} : vector<512x32xf32> to vector<32x32xf32>
    %21 = vector.extract_strided_slice %10 {offsets = [320, 0], sizes = [32, 32], strides = [1, 1]} : vector<512x32xf32> to vector<32x32xf32>
    %22 = vector.extract_strided_slice %10 {offsets = [352, 0], sizes = [32, 32], strides = [1, 1]} : vector<512x32xf32> to vector<32x32xf32>
    %23 = vector.extract_strided_slice %10 {offsets = [384, 0], sizes = [32, 32], strides = [1, 1]} : vector<512x32xf32> to vector<32x32xf32>
    %24 = vector.extract_strided_slice %10 {offsets = [416, 0], sizes = [32, 32], strides = [1, 1]} : vector<512x32xf32> to vector<32x32xf32>
    %25 = vector.extract_strided_slice %10 {offsets = [448, 0], sizes = [32, 32], strides = [1, 1]} : vector<512x32xf32> to vector<32x32xf32>
    %26 = vector.extract_strided_slice %10 {offsets = [480, 0], sizes = [32, 32], strides = [1, 1]} : vector<512x32xf32> to vector<32x32xf32>
    %27 = tpu.concatenate %11, %12, %13, %14, %15, %16, %17, %18, %19, %20, %21, %22, %23, %24, %25, %26 in 1 : vector<32x32xf32>, vector<32x32xf32>, vector<32x32xf32>, vector<32x32xf32>, vector<32x32xf32>, vector<32x32xf32>, vector<32x32xf32>, vector<32x32xf32>, vector<32x32xf32>, vector<32x32xf32>, vector<32x32xf32>, vector<32x32xf32>, vector<32x32xf32>, vector<32x32xf32>, vector<32x32xf32>, vector<32x32xf32> -> vector<32x512xf32>
    %c0_9 = arith.constant 0 : index
    %c0_10 = arith.constant 0 : index
    %28 = vector.load %arg3[%c0_9, %c0_10] : memref<512x32xf32, #tpu.memory_space<vmem>>, vector<512x32xf32>
    %cst_11 = arith.constant dense<0.000000e+00> : vector<32x32xf32>
    %29 = tpu.matmul %27, %28, %cst_11 {dimension_numbers = #tpu.dot_dimension_numbers<[1], [0], [0], [1], [0, 0, 1, 1], [], []>} : vector<32x512xf32>, vector<512x32xf32>, vector<32x32xf32> -> vector<32x32xf32>
    %30 = vector.extract_strided_slice %0 {offsets = [1, 0], sizes = [1, 32], strides = [1, 1]} : vector<4x32xf32> to vector<1x32xf32>
    %31 = vector.broadcast %30 : vector<1x32xf32> to vector<32x32xf32>
    %32 = arith.addf %29, %31 : vector<32x32xf32>
    %cst_12 = arith.constant 0.000000e+00 : f32
    %33 = vector.broadcast %cst_12 : f32 to vector<32x32xf32>
    %34 = arith.maximumf %32, %33 : vector<32x32xf32>
    %c0_13 = arith.constant 0 : index
    %c0_14 = arith.constant 0 : index
    %35 = vector.load %arg8[%c0_13, %c0_14] : memref<128x32xf32, #tpu.memory_space<vmem>>, vector<128x32xf32>
    %cst_15 = arith.constant dense<0.000000e+00> : vector<128x32xf32>
    %36 = tpu.matmul %35, %34, %cst_15 {dimension_numbers = #tpu.dot_dimension_numbers<[1], [0], [0], [1], [0, 0, 1, 1], [], []>} : vector<128x32xf32>, vector<32x32xf32>, vector<128x32xf32> -> vector<128x32xf32>
    %37 = vector.extract_strided_slice %36 {offsets = [0, 0], sizes = [8, 32], strides = [1, 1]} : vector<128x32xf32> to vector<8x32xf32>
    %38 = vector.extract_strided_slice %36 {offsets = [8, 0], sizes = [8, 32], strides = [1, 1]} : vector<128x32xf32> to vector<8x32xf32>
    %39 = vector.extract_strided_slice %36 {offsets = [16, 0], sizes = [8, 32], strides = [1, 1]} : vector<128x32xf32> to vector<8x32xf32>
    %40 = vector.extract_strided_slice %36 {offsets = [24, 0], sizes = [8, 32], strides = [1, 1]} : vector<128x32xf32> to vector<8x32xf32>
    %41 = vector.extract_strided_slice %36 {offsets = [32, 0], sizes = [8, 32], strides = [1, 1]} : vector<128x32xf32> to vector<8x32xf32>
    %42 = vector.extract_strided_slice %36 {offsets = [40, 0], sizes = [8, 32], strides = [1, 1]} : vector<128x32xf32> to vector<8x32xf32>
    %43 = vector.extract_strided_slice %36 {offsets = [48, 0], sizes = [8, 32], strides = [1, 1]} : vector<128x32xf32> to vector<8x32xf32>
    %44 = vector.extract_strided_slice %36 {offsets = [56, 0], sizes = [8, 32], strides = [1, 1]} : vector<128x32xf32> to vector<8x32xf32>
    %45 = vector.extract_strided_slice %36 {offsets = [64, 0], sizes = [8, 32], strides = [1, 1]} : vector<128x32xf32> to vector<8x32xf32>
    %46 = vector.extract_strided_slice %36 {offsets = [72, 0], sizes = [8, 32], strides = [1, 1]} : vector<128x32xf32> to vector<8x32xf32>
    %47 = vector.extract_strided_slice %36 {offsets = [80, 0], sizes = [8, 32], strides = [1, 1]} : vector<128x32xf32> to vector<8x32xf32>
    %48 = vector.extract_strided_slice %36 {offsets = [88, 0], sizes = [8, 32], strides = [1, 1]} : vector<128x32xf32> to vector<8x32xf32>
    %49 = vector.extract_strided_slice %36 {offsets = [96, 0], sizes = [8, 32], strides = [1, 1]} : vector<128x32xf32> to vector<8x32xf32>
    %50 = vector.extract_strided_slice %36 {offsets = [104, 0], sizes = [8, 32], strides = [1, 1]} : vector<128x32xf32> to vector<8x32xf32>
    %51 = vector.extract_strided_slice %36 {offsets = [112, 0], sizes = [8, 32], strides = [1, 1]} : vector<128x32xf32> to vector<8x32xf32>
    %52 = vector.extract_strided_slice %36 {offsets = [120, 0], sizes = [8, 32], strides = [1, 1]} : vector<128x32xf32> to vector<8x32xf32>
    %53 = tpu.concatenate %37, %38, %39, %40, %41, %42, %43, %44, %45, %46, %47, %48, %49, %50, %51, %52 in 1 : vector<8x32xf32>, vector<8x32xf32>, vector<8x32xf32>, vector<8x32xf32>, vector<8x32xf32>, vector<8x32xf32>, vector<8x32xf32>, vector<8x32xf32>, vector<8x32xf32>, vector<8x32xf32>, vector<8x32xf32>, vector<8x32xf32>, vector<8x32xf32>, vector<8x32xf32>, vector<8x32xf32>, vector<8x32xf32> -> vector<8x512xf32>
    %c0_16 = arith.constant 0 : index
    %c0_17 = arith.constant 0 : index
    %54 = vector.load %arg4[%c0_16, %c0_17] : memref<512x32xf32, #tpu.memory_space<vmem>>, vector<512x32xf32>
    %cst_18 = arith.constant dense<0.000000e+00> : vector<8x32xf32>
    %55 = tpu.matmul %53, %54, %cst_18 {dimension_numbers = #tpu.dot_dimension_numbers<[1], [0], [0], [1], [0, 0, 1, 1], [], []>} : vector<8x512xf32>, vector<512x32xf32>, vector<8x32xf32> -> vector<8x32xf32>
    %56 = vector.extract_strided_slice %0 {offsets = [2, 0], sizes = [1, 32], strides = [1, 1]} : vector<4x32xf32> to vector<1x32xf32>
    %57 = vector.broadcast %56 : vector<1x32xf32> to vector<8x32xf32>
    %58 = arith.addf %55, %57 : vector<8x32xf32>
    %cst_19 = arith.constant 0.000000e+00 : f32
    %59 = vector.broadcast %cst_19 : f32 to vector<8x32xf32>
    %60 = arith.maximumf %58, %59 : vector<8x32xf32>
    %c0_20 = arith.constant 0 : index
    %c0_21 = arith.constant 0 : index
    %61 = vector.load %arg9[%c0_20, %c0_21] : memref<72x8xf32, #tpu.memory_space<vmem>>, vector<72x8xf32>
    %cst_22 = arith.constant dense<0.000000e+00> : vector<72x32xf32>
    %62 = tpu.matmul %61, %60, %cst_22 {dimension_numbers = #tpu.dot_dimension_numbers<[1], [0], [0], [1], [0, 0, 1, 1], [], []>} : vector<72x8xf32>, vector<8x32xf32>, vector<72x32xf32> -> vector<72x32xf32>
    %63 = vector.extract_strided_slice %62 {offsets = [0, 0], sizes = [8, 32], strides = [1, 1]} : vector<72x32xf32> to vector<8x32xf32>
    %64 = vector.extract_strided_slice %62 {offsets = [8, 0], sizes = [8, 32], strides = [1, 1]} : vector<72x32xf32> to vector<8x32xf32>
    %65 = vector.extract_strided_slice %62 {offsets = [16, 0], sizes = [8, 32], strides = [1, 1]} : vector<72x32xf32> to vector<8x32xf32>
    %66 = vector.extract_strided_slice %62 {offsets = [24, 0], sizes = [8, 32], strides = [1, 1]} : vector<72x32xf32> to vector<8x32xf32>
    %67 = vector.extract_strided_slice %62 {offsets = [32, 0], sizes = [8, 32], strides = [1, 1]} : vector<72x32xf32> to vector<8x32xf32>
    %68 = vector.extract_strided_slice %62 {offsets = [40, 0], sizes = [8, 32], strides = [1, 1]} : vector<72x32xf32> to vector<8x32xf32>
    %69 = vector.extract_strided_slice %62 {offsets = [48, 0], sizes = [8, 32], strides = [1, 1]} : vector<72x32xf32> to vector<8x32xf32>
    %70 = vector.extract_strided_slice %62 {offsets = [56, 0], sizes = [8, 32], strides = [1, 1]} : vector<72x32xf32> to vector<8x32xf32>
    %71 = vector.extract_strided_slice %62 {offsets = [64, 0], sizes = [8, 32], strides = [1, 1]} : vector<72x32xf32> to vector<8x32xf32>
    %72 = tpu.concatenate %63, %64, %65, %66, %67, %68, %69, %70, %71 in 1 : vector<8x32xf32>, vector<8x32xf32>, vector<8x32xf32>, vector<8x32xf32>, vector<8x32xf32>, vector<8x32xf32>, vector<8x32xf32>, vector<8x32xf32>, vector<8x32xf32> -> vector<8x288xf32>
    %c0_23 = arith.constant 0 : index
    %c0_24 = arith.constant 0 : index
    %73 = vector.load %arg5[%c0_23, %c0_24] : memref<288x32xf32, #tpu.memory_space<vmem>>, vector<288x32xf32>
    %cst_25 = arith.constant dense<0.000000e+00> : vector<8x32xf32>
    %74 = tpu.matmul %72, %73, %cst_25 {dimension_numbers = #tpu.dot_dimension_numbers<[1], [0], [0], [1], [0, 0, 1, 1], [], []>} : vector<8x288xf32>, vector<288x32xf32>, vector<8x32xf32> -> vector<8x32xf32>
    %75 = vector.extract_strided_slice %0 {offsets = [3, 0], sizes = [1, 32], strides = [1, 1]} : vector<4x32xf32> to vector<1x32xf32>
    %76 = vector.broadcast %75 : vector<1x32xf32> to vector<8x32xf32>
    %77 = arith.addf %74, %76 : vector<8x32xf32>
    %cst_26 = arith.constant 0.000000e+00 : f32
    %78 = vector.broadcast %cst_26 : f32 to vector<8x32xf32>
    %79 = arith.maximumf %77, %78 : vector<8x32xf32>
    %c0_27 = arith.constant 0 : index
    %c0_28 = arith.constant 0 : index
    %80 = vector.load %arg10[%c0_27, %c0_28] : memref<8x32xf32, #tpu.memory_space<vmem>>, vector<8x32xf32>
    tpu.vector_store %arg10[%c0_27, %c0_28], %79 {strides = array<i32>} : memref<8x32xf32, #tpu.memory_space<vmem>>, vector<8x32xf32>,
    return
  }
  func.func @transform_0(%arg0: i32) -> (i32, i32) {
    %c0_i32 = arith.constant 0 : i32
    %c0_i32_0 = arith.constant 0 : i32
    %c0_i32_1 = arith.constant 0 : i32
    return %c0_i32, %c0_i32_0 : i32, i32
  }
  func.func @transform_1(%arg0: i32) -> (i32, i32) {
    %c0_i32 = arith.constant 0 : i32
    %c0_i32_0 = arith.constant 0 : i32
    %c0_i32_1 = arith.constant 0 : i32
    return %c0_i32, %c0_i32_0 : i32, i32
  }
  func.func @transform_2(%arg0: i32) -> (i32, i32) {
    %c0_i32 = arith.constant 0 : i32
    %c0_i32_0 = arith.constant 0 : i32
    %c0_i32_1 = arith.constant 0 : i32
    return %c0_i32, %c0_i32_0 : i32, i32
  }
  func.func @transform_3(%arg0: i32) -> (i32, i32) {
    %c0_i32 = arith.constant 0 : i32
    %c0_i32_0 = arith.constant 0 : i32
    %c0_i32_1 = arith.constant 0 : i32
    return %c0_i32, %c0_i32_0 : i32, i32
  }
  func.func @transform_4(%arg0: i32) -> (i32, i32) {
    %c0_i32 = arith.constant 0 : i32
    %c0_i32_0 = arith.constant 0 : i32
    %c0_i32_1 = arith.constant 0 : i32
    return %c0_i32, %c0_i32_0 : i32, i32
  }
  func.func @transform_5(%arg0: i32) -> (i32, i32) {
    %c0_i32 = arith.constant 0 : i32
    %c0_i32_0 = arith.constant 0 : i32
    %c0_i32_1 = arith.constant 0 : i32
    return %c0_i32, %c0_i32_0 : i32, i32
  }
  func.func @transform_6(%arg0: i32) -> (i32, i32) {
    %c0_i32 = arith.constant 0 : i32
    %c0_i32_0 = arith.constant 0 : i32
    %c0_i32_1 = arith.constant 0 : i32
    return %c0_i32, %c0_i32_0 : i32, i32
  }
  func.func @transform_7(%arg0: i32) -> (i32, i32) {
    %c0_i32 = arith.constant 0 : i32
    %c0_i32_0 = arith.constant 0 : i32
    %c0_i32_1 = arith.constant 0 : i32
    return %c0_i32, %c0_i32_0 : i32, i32
  }
  func.func @transform_8(%arg0: i32) -> (i32, i32) {
    %c0_i32 = arith.constant 0 : i32
    %c0_i32_0 = arith.constant 0 : i32
    %c0_i32_1 = arith.constant 0 : i32
    return %c0_i32, %c0_i32_0 : i32, i32
  }
  func.func @transform_9(%arg0: i32) -> (i32, i32) {
    %c0_i32 = arith.constant 0 : i32
    %c0_i32_0 = arith.constant 0 : i32
    %c0_i32_1 = arith.constant 0 : i32
    return %c0_i32, %c0_i32_0 : i32, i32
  }
}

</mosaic_0001>

<llo_original>
// kernel: sgr_embedding_forward.1
$region0: #{sgr_embedding_forward.1}
  #allocation0 [shape = 'u32[]', space=smem, size = 0x4, offset = 0x4, fixed_abs, tag = 'smem constant byte address 0x4 - core index']
  #allocation1 [shape = 'u32[72,128]{1,0:T(1,128)}', space=vmem, size = 0x9000, scoped, tag = 'internal scratch']
  %s0 = inlined_call_operand.vmem [shape: f32[128,64], index: 0, kind: input, shape index: {}]
  %s1 = inlined_call_operand.vmem [shape: f32[64,32], index: 1, kind: input, shape index: {}]
  %s2 = inlined_call_operand.vmem [shape: f32[512,32], index: 2, kind: input, shape index: {}]
  %s3 = inlined_call_operand.vmem [shape: f32[512,32], index: 3, kind: input, shape index: {}]
  %s4 = inlined_call_operand.vmem [shape: f32[288,32], index: 4, kind: input, shape index: {}]
  %s5 = inlined_call_operand.vmem [shape: f32[4,32], index: 5, kind: input, shape index: {}]
  %s6 = inlined_call_operand.vmem [shape: f32[512,128], index: 6, kind: input, shape index: {}]
  %s7 = inlined_call_operand.vmem [shape: f32[128,32], index: 7, kind: input, shape index: {}]
  %s8 = inlined_call_operand.vmem [shape: f32[72,8], index: 8, kind: input, shape index: {}]
  %s9 = inlined_call_operand.hbm [shape: f32[8,32], index: 9, kind: output, shape index: {}]
  %s10 = sld [smem:[#allocation0]]
  $region46: #{sgr_embedding_forward.1} parent=0
    _
  %s12 = ssub.s32 1, %s10
  %s13 = scalar_select 0, %s12, %s10
  $region1: #{sgr_embedding_forward.1} parent=0
    #allocation2 [shape = 'u8[4096]{0}', space=vmem, size = 0x1000, scoped, tag = 'output window, operand 0, single buffered']
    #allocation3 [shape = 's32[1]{0}', space=sflag, size = 0x4, scoped, tag = 'scoped memory for sgr_embedding_forward.1']
    %14 = vsyncpa [#allocation3], 0
    // Predicated region
    $region2: #{sgr_embedding_forward.1} parent=1 // pred_check
      _
    $region3: #{sgr_embedding_forward.1} parent=1 // pred_check_branch
      %16 = sbr.rel (0) target = $region5
    $region4: #{sgr_embedding_forward.1} parent=1 // pred_region
      _
    $region5: #{sgr_embedding_forward.1} parent=1 // pred_fallthru
      _
    // Predicated region
    $region6: #{sgr_embedding_forward.1} parent=1 // pred_check
      _
    $region7: #{sgr_embedding_forward.1} parent=1 // pred_check_branch
      %18 = sbr.rel (0) target = $region9
    $region8: #{sgr_embedding_forward.1} parent=1 // pred_region
      _
    $region9: #{sgr_embedding_forward.1} parent=1 // pred_fallthru
      _
    // Predicated region
    $region10: #{sgr_embedding_forward.1} parent=1 // pred_check
      _
    $region11: #{sgr_embedding_forward.1} parent=1 // pred_check_branch
      %20 = sbr.rel (0) target = $region13
    $region12: #{sgr_embedding_forward.1} parent=1 // pred_region
      _
    $region13: #{sgr_embedding_forward.1} parent=1 // pred_fallthru
      _
    // Predicated region
    $region14: #{sgr_embedding_forward.1} parent=1 // pred_check
      _
    $region15: #{sgr_embedding_forward.1} parent=1 // pred_check_branch
      %22 = sbr.rel (0) target = $region17
    $region16: #{sgr_embedding_forward.1} parent=1 // pred_region
      _
    $region17: #{sgr_embedding_forward.1} parent=1 // pred_fallthru
      _
    // Predicated region
    $region18: #{sgr_embedding_forward.1} parent=1 // pred_check
      _
    $region19: #{sgr_embedding_forward.1} parent=1 // pred_check_branch
      %24 = sbr.rel (0) target = $region21
    $region20: #{sgr_embedding_forward.1} parent=1 // pred_region
      _
    $region21: #{sgr_embedding_forward.1} parent=1 // pred_fallthru
      _
    // Predicated region
    $region22: #{sgr_embedding_forward.1} parent=1 // pred_check
      _
    $region23: #{sgr_embedding_forward.1} parent=1 // pred_check_branch
      %26 = sbr.rel (0) target = $region25
    $region24: #{sgr_embedding_forward.1} parent=1 // pred_region
      _
    $region25: #{sgr_embedding_forward.1} parent=1 // pred_fallthru
      _
    // Predicated region
    $region26: #{sgr_embedding_forward.1} parent=1 // pred_check
      _
    $region27: #{sgr_embedding_forward.1} parent=1 // pred_check_branch
      %28 = sbr.rel (0) target = $region29
    $region28: #{sgr_embedding_forward.1} parent=1 // pred_region
      _
    $region29: #{sgr_embedding_forward.1} parent=1 // pred_fallthru
      _
    // Predicated region
    $region30: #{sgr_embedding_forward.1} parent=1 // pred_check
      _
    $region31: #{sgr_embedding_forward.1} parent=1 // pred_check_branch
      %30 = sbr.rel (0) target = $region33
    $region32: #{sgr_embedding_forward.1} parent=1 // pred_region
      _
    $region33: #{sgr_embedding_forward.1} parent=1 // pred_fallthru
      _
    // Predicated region
    $region34: #{sgr_embedding_forward.1} parent=1 // pred_check
      _
    $region35: #{sgr_embedding_forward.1} parent=1 // pred_check_branch
      %32 = sbr.rel (0) target = $region37
    $region36: #{sgr_embedding_forward.1} parent=1 // pred_region
      _
    $region37: #{sgr_embedding_forward.1} parent=1 // pred_fallthru
      _
    %v33 = vld [vmem:[%s5] sm:$0xf]
    %v34 = vld [vmem:[%s0] sm:$0xff]
    %v35 = vld [vmem:[%s0 + $0x8] sm:$0xff]
    %v36 = vld [vmem:[%s0 + $0x10] sm:$0xff]
    %v37 = vld [vmem:[%s0 + $0x18] sm:$0xff]
    %v38 = vld [vmem:[%s0 + $0x20] sm:$0xff]
    %v39 = vld [vmem:[%s0 + $0x28] sm:$0xff]
    %v40 = vld [vmem:[%s0 + $0x30] sm:$0xff]
    %v41 = vld [vmem:[%s0 + $0x38] sm:$0xff]
    %v42 = vld [vmem:[%s0 + $0x40] sm:$0xff]
    %v43 = vld [vmem:[%s0 + $0x48] sm:$0xff]
    %v44 = vld [vmem:[%s0 + $0x50] sm:$0xff]
    %v45 = vld [vmem:[%s0 + $0x58] sm:$0xff]
    %v46 = vld [vmem:[%s0 + $0x60] sm:$0xff]
    %v47 = vld [vmem:[%s0 + $0x68] sm:$0xff]
    %v48 = vld [vmem:[%s0 + $0x70] sm:$0xff]
    %v49 = vld [vmem:[%s0 + $0x78] sm:$0xff]
    %v50 = vld [vmem:[%s1] sm:$0xff]
    %v51 = vld [vmem:[%s1 + $0x8] sm:$0xff]
    %v52 = vld [vmem:[%s1 + $0x10] sm:$0xff]
    %v53 = vld [vmem:[%s1 + $0x18] sm:$0xff]
    %v54 = vld [vmem:[%s1 + $0x20] sm:$0xff]
    %v55 = vld [vmem:[%s1 + $0x28] sm:$0xff]
    %v56 = vld [vmem:[%s1 + $0x30] sm:$0xff]
    %v57 = vld [vmem:[%s1 + $0x38] sm:$0xff]
    %v58 = vperm.slane %v33, 0
    %vm59 = vcmask 523264
    %v61 = vsel %vm59, %v34, 0
    %v64 = vsel %vm59, %v35, 0
    %v67 = vsel %vm59, %v36, 0
    %v70 = vsel %vm59, %v37, 0
    %v73 = vsel %vm59, %v38, 0
    %v76 = vsel %vm59, %v39, 0
    %v79 = vsel %vm59, %v40, 0
    %v82 = vsel %vm59, %v41, 0
    %v85 = vsel %vm59, %v42, 0
    %v88 = vsel %vm59, %v43, 0
    %v91 = vsel %vm59, %v44, 0
    %v94 = vsel %vm59, %v45, 0
    %v97 = vsel %vm59, %v46, 0
    %v100 = vsel %vm59, %v47, 0
    %v103 = vsel %vm59, %v48, 0
    %v106 = vsel %vm59, %v49, 0
    %108 = vmatpush.msra.mxu0 0.0
    %109 = vmatpush.msra.mxu0 0.0
    %110 = vmatpush.msra.mxu0 0.0
    %111 = vmatpush.msra.mxu0 0.0
    %112 = vmatpush.msra.mxu0 0.0
    %113 = vmatpush.msra.mxu0 0.0
    %114 = vmatpush.msra.mxu0 0.0
    %115 = vmatpush.msra.mxu0 0.0
    %116 = vmatpush.msra.mxu0 %v57
    %117 = vmatpush.msra.mxu0 %v56
    %118 = vmatpush.msra.mxu0 %v55
    %119 = vmatpush.msra.mxu0 %v54
    %120 = vmatpush.msra.mxu0 %v53
    %121 = vmatpush.msra.mxu0 %v52
    %122 = vmatpush.msra.mxu0 %v51
    %123 = vmatpush.msra.mxu0 %v50
    %124 = vmatmul.f32.gmra.mxu0 %v61
    %v125 = vpop.f32.mrf.mxu0
    %v126 = vadd.f32 %v58, %v125
    %127 = vmatmul.f32.gmra.mxu0 %v64
    %v128 = vpop.f32.mrf.mxu0
    %v129 = vadd.f32 %v58, %v128
    %130 = vmatmul.f32.gmra.mxu0 %v67
    %v131 = vpop.f32.mrf.mxu0
    %v132 = vadd.f32 %v58, %v131
    %133 = vmatmul.f32.gmra.mxu0 %v70
    %v134 = vpop.f32.mrf.mxu0
    %v135 = vadd.f32 %v58, %v134
    %136 = vmatmul.f32.gmra.mxu0 %v73
    %v137 = vpop.f32.mrf.mxu0
    %v138 = vadd.f32 %v58, %v137
    %139 = vmatmul.f32.gmra.mxu0 %v76
    %v140 = vpop.f32.mrf.mxu0
    %v141 = vadd.f32 %v58, %v140
    %142 = vmatmul.f32.gmra.mxu0 %v79
    %v143 = vpop.f32.mrf.mxu0
    %v144 = vadd.f32 %v58, %v143
    %145 = vmatmul.f32.gmra.mxu0 %v82
    %v146 = vpop.f32.mrf.mxu0
    %v147 = vadd.f32 %v58, %v146
    %148 = vmatmul.f32.gmra.mxu0 %v85
    %v149 = vpop.f32.mrf.mxu0
    %v150 = vadd.f32 %v58, %v149
    %151 = vmatmul.f32.gmra.mxu0 %v88
    %v152 = vpop.f32.mrf.mxu0
    %v153 = vadd.f32 %v58, %v152
    %154 = vmatmul.f32.gmra.mxu0 %v91
    %v155 = vpop.f32.mrf.mxu0
    %v156 = vadd.f32 %v58, %v155
    %157 = vmatmul.f32.gmra.mxu0 %v94
    %v158 = vpop.f32.mrf.mxu0
    %v159 = vadd.f32 %v58, %v158
    %160 = vmatmul.f32.gmra.mxu0 %v97
    %v161 = vpop.f32.mrf.mxu0
    %v162 = vadd.f32 %v58, %v161
    %163 = vmatmul.f32.gmra.mxu0 %v100
    %v164 = vpop.f32.mrf.mxu0
    %v165 = vadd.f32 %v58, %v164
    %166 = vmatmul.f32.gmra.mxu0 %v103
    %v167 = vpop.f32.mrf.mxu0
    %v168 = vadd.f32 %v58, %v167
    %169 = vmatmul.f32.gmra.mxu0 %v106
    %v170 = vpop.f32.mrf.mxu0
    %v171 = vadd.f32 %v58, %v170
    %172 = vdwg.mxu0
    %v173 = vmax.f32 %v126, 0.0
    %v174 = vmax.f32 %v129, 0.0
    %v175 = vmax.f32 %v132, 0.0
    %v176 = vmax.f32 %v135, 0.0
    %v177 = vmax.f32 %v138, 0.0
    %v178 = vmax.f32 %v141, 0.0
    %v179 = vmax.f32 %v144, 0.0
    %v180 = vmax.f32 %v147, 0.0
    %v181 = vmax.f32 %v150, 0.0
    %v182 = vmax.f32 %v153, 0.0
    %v183 = vmax.f32 %v156, 0.0
    %v184 = vmax.f32 %v159, 0.0
    %v185 = vmax.f32 %v162, 0.0
    %v186 = vmax.f32 %v165, 0.0
    %v187 = vmax.f32 %v168, 0.0
    %v188 = vmax.f32 %v171, 0.0
    %v189 = vld [vmem:[%s6] sm:$0xff]
    %v190 = vld [vmem:[%s6 + $0x8] sm:$0xff]
    %v191 = vld [vmem:[%s6 + $0x10] sm:$0xff]
    %v192 = vld [vmem:[%s6 + $0x18] sm:$0xff]
    %v193 = vld [vmem:[%s6 + $0x20] sm:$0xff]
    %v194 = vld [vmem:[%s6 + $0x28] sm:$0xff]
    %v195 = vld [vmem:[%s6 + $0x30] sm:$0xff]
    %v196 = vld [vmem:[%s6 + $0x38] sm:$0xff]
    %v197 = vld [vmem:[%s6 + $0x40] sm:$0xff]
    %v198 = vld [vmem:[%s6 + $0x48] sm:$0xff]
    %v199 = vld [vmem:[%s6 + $0x50] sm:$0xff]
    %v200 = vld [vmem:[%s6 + $0x58] sm:$0xff]
    %v201 = vld [vmem:[%s6 + $0x60] sm:$0xff]
    %v202 = vld [vmem:[%s6 + $0x68] sm:$0xff]
    %v203 = vld [vmem:[%s6 + $0x70] sm:$0xff]
    %v204 = vld [vmem:[%s6 + $0x78] sm:$0xff]
    %v205 = vld [vmem:[%s6 + $0x80] sm:$0xff]
    %v206 = vld [vmem:[%s6 + $0x88] sm:$0xff]
    %v207 = vld [vmem:[%s6 + $0x90] sm:$0xff]
    %v208 = vld [vmem:[%s6 + $0x98] sm:$0xff]
    %v209 = vld [vmem:[%s6 + $0xa0] sm:$0xff]
    %v210 = vld [vmem:[%s6 + $0xa8] sm:$0xff]
    %v211 = vld [vmem:[%s6 + $0xb0] sm:$0xff]
    %v212 = vld [vmem:[%s6 + $0xb8] sm:$0xff]
    %v213 = vld [vmem:[%s6 + $0xc0] sm:$0xff]
    %v214 = vld [vmem:[%s6 + $0xc8] sm:$0xff]
    %v215 = vld [vmem:[%s6 + $0xd0] sm:$0xff]
    %v216 = vld [vmem:[%s6 + $0xd8] sm:$0xff]
    %v217 = vld [vmem:[%s6 + $0xe0] sm:$0xff]
    %v218 = vld [vmem:[%s6 + $0xe8] sm:$0xff]
    %v219 = vld [vmem:[%s6 + $0xf0] sm:$0xff]
    %v220 = vld [vmem:[%s6 + $0xf8] sm:$0xff]
    %v221 = vld [vmem:[%s6 + $0x100] sm:$0xff]
    %v222 = vld [vmem:[%s6 + $0x108] sm:$0xff]
    %v223 = vld [vmem:[%s6 + $0x110] sm:$0xff]
    %v224 = vld [vmem:[%s6 + $0x118] sm:$0xff]
    %v225 = vld [vmem:[%s6 + $0x120] sm:$0xff]
    %v226 = vld [vmem:[%s6 + $0x128] sm:$0xff]
    %v227 = vld [vmem:[%s6 + $0x130] sm:$0xff]
    %v228 = vld [vmem:[%s6 + $0x138] sm:$0xff]
    %v229 = vld [vmem:[%s6 + $0x140] sm:$0xff]
    %v230 = vld [vmem:[%s6 + $0x148] sm:$0xff]
    %v231 = vld [vmem:[%s6 + $0x150] sm:$0xff]
    %v232 = vld [vmem:[%s6 + $0x158] sm:$0xff]
    %v233 = vld [vmem:[%s6 + $0x160] sm:$0xff]
    %v234 = vld [vmem:[%s6 + $0x168] sm:$0xff]
    %v235 = vld [vmem:[%s6 + $0x170] sm:$0xff]
    %v236 = vld [vmem:[%s6 + $0x178] sm:$0xff]
    %v237 = vld [vmem:[%s6 + $0x180] sm:$0xff]
    %v238 = vld [vmem:[%s6 + $0x188] sm:$0xff]
    %v239 = vld [vmem:[%s6 + $0x190] sm:$0xff]
    %v240 = vld [vmem:[%s6 + $0x198] sm:$0xff]
    %v241 = vld [vmem:[%s6 + $0x1a0] sm:$0xff]
    %v242 = vld [vmem:[%s6 + $0x1a8] sm:$0xff]
    %v243 = vld [vmem:[%s6 + $0x1b0] sm:$0xff]
    %v244 = vld [vmem:[%s6 + $0x1b8] sm:$0xff]
    %v245 = vld [vmem:[%s6 + $0x1c0] sm:$0xff]
    %v246 = vld [vmem:[%s6 + $0x1c8] sm:$0xff]
    %v247 = vld [vmem:[%s6 + $0x1d0] sm:$0xff]
    %v248 = vld [vmem:[%s6 + $0x1d8] sm:$0xff]
    %v249 = vld [vmem:[%s6 + $0x1e0] sm:$0xff]
    %v250 = vld [vmem:[%s6 + $0x1e8] sm:$0xff]
    %v251 = vld [vmem:[%s6 + $0x1f0] sm:$0xff]
    %v252 = vld [vmem:[%s6 + $0x1f8] sm:$0xff]
    %253 = vmatpush.msra.mxu0 %v188
    %254 = vmatpush.msra.mxu0 %v187
    %255 = vmatpush.msra.mxu0 %v186
    %256 = vmatpush.msra.mxu0 %v185
    %257 = vmatpush.msra.mxu0 %v184
    %258 = vmatpush.msra.mxu0 %v183
    %259 = vmatpush.msra.mxu0 %v182
    %260 = vmatpush.msra.mxu0 %v181
    %261 = vmatpush.msra.mxu0 %v180
    %262 = vmatpush.msra.mxu0 %v179
    %263 = vmatpush.msra.mxu0 %v178
    %264 = vmatpush.msra.mxu0 %v177
    %265 = vmatpush.msra.mxu0 %v176
    %266 = vmatpush.msra.mxu0 %v175
    %267 = vmatpush.msra.mxu0 %v174
    %268 = vmatpush.msra.mxu0 %v173
    %269 = vmatmul.f32.gmra.mxu0 %v189
    %v270 = vpop.f32.mrf.mxu0
    %v271 = vadd.f32 0.0, %v270
    %272 = vmatmul.f32.gmra.mxu0 %v190
    %v273 = vpop.f32.mrf.mxu0
    %v274 = vadd.f32 0.0, %v273
    %275 = vmatmul.f32.gmra.mxu0 %v191
    %v276 = vpop.f32.mrf.mxu0
    %v277 = vadd.f32 0.0, %v276
    %278 = vmatmul.f32.gmra.mxu0 %v192
    %v279 = vpop.f32.mrf.mxu0
    %v280 = vadd.f32 0.0, %v279
    %281 = vmatmul.f32.gmra.mxu0 %v193
    %v282 = vpop.f32.mrf.mxu0
    %v283 = vadd.f32 0.0, %v282
    %284 = vmatmul.f32.gmra.mxu0 %v194
    %v285 = vpop.f32.mrf.mxu0
    %v286 = vadd.f32 0.0, %v285
    %287 = vmatmul.f32.gmra.mxu0 %v195
    %v288 = vpop.f32.mrf.mxu0
    %v289 = vadd.f32 0.0, %v288
    %290 = vmatmul.f32.gmra.mxu0 %v196
    %v291 = vpop.f32.mrf.mxu0
    %v292 = vadd.f32 0.0, %v291
    %293 = vmatmul.f32.gmra.mxu0 %v197
    %v294 = vpop.f32.mrf.mxu0
    %v295 = vadd.f32 0.0, %v294
    %296 = vmatmul.f32.gmra.mxu0 %v198
    %v297 = vpop.f32.mrf.mxu0
    %v298 = vadd.f32 0.0, %v297
    %299 = vmatmul.f32.gmra.mxu0 %v199
    %v300 = vpop.f32.mrf.mxu0
    %v301 = vadd.f32 0.0, %v300
    %302 = vmatmul.f32.gmra.mxu0 %v200
    %v303 = vpop.f32.mrf.mxu0
    %v304 = vadd.f32 0.0, %v303
    %305 = vmatmul.f32.gmra.mxu0 %v201
    %v306 = vpop.f32.mrf.mxu0
    %v307 = vadd.f32 0.0, %v306
    %308 = vmatmul.f32.gmra.mxu0 %v202
    %v309 = vpop.f32.mrf.mxu0
    %v310 = vadd.f32 0.0, %v309
    %311 = vmatmul.f32.gmra.mxu0 %v203
    %v312 = vpop.f32.mrf.mxu0
    %v313 = vadd.f32 0.0, %v312
    %314 = vmatmul.f32.gmra.mxu0 %v204
    %v315 = vpop.f32.mrf.mxu0
    %v316 = vadd.f32 0.0, %v315
    %317 = vmatmul.f32.gmra.mxu0 %v205
    %v318 = vpop.f32.mrf.mxu0
    %v319 = vadd.f32 0.0, %v318
    %320 = vmatmul.f32.gmra.mxu0 %v206
    %v321 = vpop.f32.mrf.mxu0
    %v322 = vadd.f32 0.0, %v321
    %323 = vmatmul.f32.gmra.mxu0 %v207
    %v324 = vpop.f32.mrf.mxu0
    %v325 = vadd.f32 0.0, %v324
    %326 = vmatmul.f32.gmra.mxu0 %v208
    %v327 = vpop.f32.mrf.mxu0
    %v328 = vadd.f32 0.0, %v327
    %329 = vmatmul.f32.gmra.mxu0 %v209
    %v330 = vpop.f32.mrf.mxu0
    %v331 = vadd.f32 0.0, %v330
    %332 = vmatmul.f32.gmra.mxu0 %v210
    %v333 = vpop.f32.mrf.mxu0
    %v334 = vadd.f32 0.0, %v333
    %335 = vmatmul.f32.gmra.mxu0 %v211
    %v336 = vpop.f32.mrf.mxu0
    %v337 = vadd.f32 0.0, %v336
    %338 = vmatmul.f32.gmra.mxu0 %v212
    %v339 = vpop.f32.mrf.mxu0
    %v340 = vadd.f32 0.0, %v339
    %341 = vmatmul.f32.gmra.mxu0 %v213
    %v342 = vpop.f32.mrf.mxu0
    %v343 = vadd.f32 0.0, %v342
    %344 = vmatmul.f32.gmra.mxu0 %v214
    %v345 = vpop.f32.mrf.mxu0
    %v346 = vadd.f32 0.0, %v345
    %347 = vmatmul.f32.gmra.mxu0 %v215
    %v348 = vpop.f32.mrf.mxu0
    %v349 = vadd.f32 0.0, %v348
    %350 = vmatmul.f32.gmra.mxu0 %v216
    %v351 = vpop.f32.mrf.mxu0
    %v352 = vadd.f32 0.0, %v351
    %353 = vmatmul.f32.gmra.mxu0 %v217
    %v354 = vpop.f32.mrf.mxu0
    %v355 = vadd.f32 0.0, %v354
    %356 = vmatmul.f32.gmra.mxu0 %v218
    %v357 = vpop.f32.mrf.mxu0
    %v358 = vadd.f32 0.0, %v357
    %359 = vmatmul.f32.gmra.mxu0 %v219
    %v360 = vpop.f32.mrf.mxu0
    %v361 = vadd.f32 0.0, %v360
    %362 = vmatmul.f32.gmra.mxu0 %v220
    %v363 = vpop.f32.mrf.mxu0
    %v364 = vadd.f32 0.0, %v363
    %365 = vmatmul.f32.gmra.mxu0 %v221
    %v366 = vpop.f32.mrf.mxu0
    %v367 = vadd.f32 0.0, %v366
    %368 = vmatmul.f32.gmra.mxu0 %v222
    %v369 = vpop.f32.mrf.mxu0
    %v370 = vadd.f32 0.0, %v369
    %371 = vmatmul.f32.gmra.mxu0 %v223
    %v372 = vpop.f32.mrf.mxu0
    %v373 = vadd.f32 0.0, %v372
    %374 = vmatmul.f32.gmra.mxu0 %v224
    %v375 = vpop.f32.mrf.mxu0
    %v376 = vadd.f32 0.0, %v375
    %377 = vmatmul.f32.gmra.mxu0 %v225
    %v378 = vpop.f32.mrf.mxu0
    %v379 = vadd.f32 0.0, %v378
    %380 = vmatmul.f32.gmra.mxu0 %v226
    %v381 = vpop.f32.mrf.mxu0
    %v382 = vadd.f32 0.0, %v381
    %383 = vmatmul.f32.gmra.mxu0 %v227
    %v384 = vpop.f32.mrf.mxu0
    %v385 = vadd.f32 0.0, %v384
    %386 = vmatmul.f32.gmra.mxu0 %v228
    %v387 = vpop.f32.mrf.mxu0
    %v388 = vadd.f32 0.0, %v387
    %389 = vmatmul.f32.gmra.mxu0 %v229
    %v390 = vpop.f32.mrf.mxu0
    %v391 = vadd.f32 0.0, %v390
    %392 = vmatmul.f32.gmra.mxu0 %v230
    %v393 = vpop.f32.mrf.mxu0
    %v394 = vadd.f32 0.0, %v393
    %395 = vmatmul.f32.gmra.mxu0 %v231
    %v396 = vpop.f32.mrf.mxu0
    %v397 = vadd.f32 0.0, %v396
    %398 = vmatmul.f32.gmra.mxu0 %v232
    %v399 = vpop.f32.mrf.mxu0
    %v400 = vadd.f32 0.0, %v399
    %401 = vmatmul.f32.gmra.mxu0 %v233
    %v402 = vpop.f32.mrf.mxu0
    %v403 = vadd.f32 0.0, %v402
    %404 = vmatmul.f32.gmra.mxu0 %v234
    %v405 = vpop.f32.mrf.mxu0
    %v406 = vadd.f32 0.0, %v405
    %407 = vmatmul.f32.gmra.mxu0 %v235
    %v408 = vpop.f32.mrf.mxu0
    %v409 = vadd.f32 0.0, %v408
    %410 = vmatmul.f32.gmra.mxu0 %v236
    %v411 = vpop.f32.mrf.mxu0
    %v412 = vadd.f32 0.0, %v411
    %413 = vmatmul.f32.gmra.mxu0 %v237
    %v414 = vpop.f32.mrf.mxu0
    %v415 = vadd.f32 0.0, %v414
    %416 = vmatmul.f32.gmra.mxu0 %v238
    %v417 = vpop.f32.mrf.mxu0
    %v418 = vadd.f32 0.0, %v417
    %419 = vmatmul.f32.gmra.mxu0 %v239
    %v420 = vpop.f32.mrf.mxu0
    %v421 = vadd.f32 0.0, %v420
    %422 = vmatmul.f32.gmra.mxu0 %v240
    %v423 = vpop.f32.mrf.mxu0
    %v424 = vadd.f32 0.0, %v423
    %425 = vmatmul.f32.gmra.mxu0 %v241
    %v426 = vpop.f32.mrf.mxu0
    %v427 = vadd.f32 0.0, %v426
    %428 = vmatmul.f32.gmra.mxu0 %v242
    %v429 = vpop.f32.mrf.mxu0
    %v430 = vadd.f32 0.0, %v429
    %431 = vmatmul.f32.gmra.mxu0 %v243
    %v432 = vpop.f32.mrf.mxu0
    %v433 = vadd.f32 0.0, %v432
    %434 = vmatmul.f32.gmra.mxu0 %v244
    %v435 = vpop.f32.mrf.mxu0
    %v436 = vadd.f32 0.0, %v435
    %437 = vmatmul.f32.gmra.mxu0 %v245
    %v438 = vpop.f32.mrf.mxu0
    %v439 = vadd.f32 0.0, %v438
    %440 = vmatmul.f32.gmra.mxu0 %v246
    %v441 = vpop.f32.mrf.mxu0
    %v442 = vadd.f32 0.0, %v441
    %443 = vmatmul.f32.gmra.mxu0 %v247
    %v444 = vpop.f32.mrf.mxu0
    %v445 = vadd.f32 0.0, %v444
    %446 = vmatmul.f32.gmra.mxu0 %v248
    %v447 = vpop.f32.mrf.mxu0
    %v448 = vadd.f32 0.0, %v447
    %449 = vmatmul.f32.gmra.mxu0 %v249
    %v450 = vpop.f32.mrf.mxu0
    %v451 = vadd.f32 0.0, %v450
    %452 = vmatmul.f32.gmra.mxu0 %v250
    %v453 = vpop.f32.mrf.mxu0
    %v454 = vadd.f32 0.0, %v453
    %455 = vmatmul.f32.gmra.mxu0 %v251
    %v456 = vpop.f32.mrf.mxu0
    %v457 = vadd.f32 0.0, %v456
    %458 = vmatmul.f32.gmra.mxu0 %v252
    %v459 = vpop.f32.mrf.mxu0
    %v460 = vadd.f32 0.0, %v459
    %461 = vdwg.mxu0
    %466 = vrot.lane.b32.xlu0 %v283, 32
    %v467 = vpop.permute.xlu0 %466
    %468 = vrot.lane.b32.xlu0 %v286, 32
    %v469 = vpop.permute.xlu0 %468
    %470 = vrot.lane.b32.xlu0 %v289, 32
    %v471 = vpop.permute.xlu0 %470
    %472 = vrot.lane.b32.xlu0 %v292, 32
    %v473 = vpop.permute.xlu0 %472
    %482 = vrot.lane.b32.xlu0 %v295, 64
    %v483 = vpop.permute.xlu0 %482
    %484 = vrot.lane.b32.xlu0 %v298, 64
    %v485 = vpop.permute.xlu0 %484
    %486 = vrot.lane.b32.xlu0 %v301, 64
    %v487 = vpop.permute.xlu0 %486
    %488 = vrot.lane.b32.xlu0 %v304, 64
    %v489 = vpop.permute.xlu0 %488
    %498 = vrot.lane.b32.xlu0 %v307, 96
    %v499 = vpop.permute.xlu0 %498
    %500 = vrot.lane.b32.xlu0 %v310, 96
    %v501 = vpop.permute.xlu0 %500
    %502 = vrot.lane.b32.xlu0 %v313, 96
    %v503 = vpop.permute.xlu0 %502
    %504 = vrot.lane.b32.xlu0 %v316, 96
    %v505 = vpop.permute.xlu0 %504
    %514 = vrot.lane.b32.xlu0 %v331, 32
    %v515 = vpop.permute.xlu0 %514
    %516 = vrot.lane.b32.xlu0 %v334, 32
    %v517 = vpop.permute.xlu0 %516
    %518 = vrot.lane.b32.xlu0 %v337, 32
    %v519 = vpop.permute.xlu0 %518
    %520 = vrot.lane.b32.xlu0 %v340, 32
    %v521 = vpop.permute.xlu0 %520
    %530 = vrot.lane.b32.xlu0 %v343, 64
    %v531 = vpop.permute.xlu0 %530
    %532 = vrot.lane.b32.xlu0 %v346, 64
    %v533 = vpop.permute.xlu0 %532
    %534 = vrot.lane.b32.xlu0 %v349, 64
    %v535 = vpop.permute.xlu0 %534
    %536 = vrot.lane.b32.xlu0 %v352, 64
    %v537 = vpop.permute.xlu0 %536
    %546 = vrot.lane.b32.xlu0 %v355, 96
    %v547 = vpop.permute.xlu0 %546
    %548 = vrot.lane.b32.xlu0 %v358, 96
    %v549 = vpop.permute.xlu0 %548
    %550 = vrot.lane.b32.xlu0 %v361, 96
    %v551 = vpop.permute.xlu0 %550
    %552 = vrot.lane.b32.xlu0 %v364, 96
    %v553 = vpop.permute.xlu0 %552
    %562 = vrot.lane.b32.xlu0 %v379, 32
    %v563 = vpop.permute.xlu0 %562
    %564 = vrot.lane.b32.xlu0 %v382, 32
    %v565 = vpop.permute.xlu0 %564
    %566 = vrot.lane.b32.xlu0 %v385, 32
    %v567 = vpop.permute.xlu0 %566
    %568 = vrot.lane.b32.xlu0 %v388, 32
    %v569 = vpop.permute.xlu0 %568
    %578 = vrot.lane.b32.xlu0 %v391, 64
    %v579 = vpop.permute.xlu0 %578
    %580 = vrot.lane.b32.xlu0 %v394, 64
    %v581 = vpop.permute.xlu0 %580
    %582 = vrot.lane.b32.xlu0 %v397, 64
    %v583 = vpop.permute.xlu0 %582
    %584 = vrot.lane.b32.xlu0 %v400, 64
    %v585 = vpop.permute.xlu0 %584
    %594 = vrot.lane.b32.xlu0 %v403, 96
    %v595 = vpop.permute.xlu0 %594
    %596 = vrot.lane.b32.xlu0 %v406, 96
    %v597 = vpop.permute.xlu0 %596
    %598 = vrot.lane.b32.xlu0 %v409, 96
    %v599 = vpop.permute.xlu0 %598
    %600 = vrot.lane.b32.xlu0 %v412, 96
    %v601 = vpop.permute.xlu0 %600
    %610 = vrot.lane.b32.xlu0 %v427, 32
    %v611 = vpop.permute.xlu0 %610
    %612 = vrot.lane.b32.xlu0 %v430, 32
    %v613 = vpop.permute.xlu0 %612
    %614 = vrot.lane.b32.xlu0 %v433, 32
    %v615 = vpop.permute.xlu0 %614
    %616 = vrot.lane.b32.xlu0 %v436, 32
    %v617 = vpop.permute.xlu0 %616
    %626 = vrot.lane.b32.xlu0 %v439, 64
    %v627 = vpop.permute.xlu0 %626
    %628 = vrot.lane.b32.xlu0 %v442, 64
    %v629 = vpop.permute.xlu0 %628
    %630 = vrot.lane.b32.xlu0 %v445, 64
    %v631 = vpop.permute.xlu0 %630
    %632 = vrot.lane.b32.xlu0 %v448, 64
    %v633 = vpop.permute.xlu0 %632
    %642 = vrot.lane.b32.xlu0 %v451, 96
    %v643 = vpop.permute.xlu0 %642
    %644 = vrot.lane.b32.xlu0 %v454, 96
    %v645 = vpop.permute.xlu0 %644
    %646 = vrot.lane.b32.xlu0 %v457, 96
    %v647 = vpop.permute.xlu0 %646
    %648 = vrot.lane.b32.xlu0 %v460, 96
    %v649 = vpop.permute.xlu0 %648
    %vm654 = vcmask 261120
    %v655 = vsel %vm654, %v271, %v467
    %v656 = vsel %vm654, %v274, %v469
    %v657 = vsel %vm654, %v277, %v471
    %v658 = vsel %vm654, %v280, %v473
    %v659 = vsel %vm59, %v655, %v483
    %v660 = vsel %vm59, %v656, %v485
    %v661 = vsel %vm59, %v657, %v487
    %v662 = vsel %vm59, %v658, %v489
    %vm663 = vcmask 785408
    %v664 = vsel %vm663, %v659, %v499
    %v665 = vsel %vm663, %v660, %v501
    %v666 = vsel %vm663, %v661, %v503
    %v667 = vsel %vm663, %v662, %v505
    %v668 = vsel %vm654, %v319, %v515
    %v669 = vsel %vm654, %v322, %v517
    %v670 = vsel %vm654, %v325, %v519
    %v671 = vsel %vm654, %v328, %v521
    %v672 = vsel %vm59, %v668, %v531
    %v673 = vsel %vm59, %v669, %v533
    %v674 = vsel %vm59, %v670, %v535
    %v675 = vsel %vm59, %v671, %v537
    %v676 = vsel %vm663, %v672, %v547
    %v677 = vsel %vm663, %v673, %v549
    %v678 = vsel %vm663, %v674, %v551
    %v679 = vsel %vm663, %v675, %v553
    %v680 = vsel %vm654, %v367, %v563
    %v681 = vsel %vm654, %v370, %v565
    %v682 = vsel %vm654, %v373, %v567
    %v683 = vsel %vm654, %v376, %v569
    %v684 = vsel %vm59, %v680, %v579
    %v685 = vsel %vm59, %v681, %v581
    %v686 = vsel %vm59, %v682, %v583
    %v687 = vsel %vm59, %v683, %v585
    %v688 = vsel %vm663, %v684, %v595
    %v689 = vsel %vm663, %v685, %v597
    %v690 = vsel %vm663, %v686, %v599
    %v691 = vsel %vm663, %v687, %v601
    %v692 = vsel %vm654, %v415, %v611
    %v693 = vsel %vm654, %v418, %v613
    %v694 = vsel %vm654, %v421, %v615
    %v695 = vsel %vm654, %v424, %v617
    %v696 = vsel %vm59, %v692, %v627
    %v697 = vsel %vm59, %v693, %v629
    %v698 = vsel %vm59, %v694, %v631
    %v699 = vsel %vm59, %v695, %v633
    %v700 = vsel %vm663, %v696, %v643
    %v701 = vsel %vm663, %v697, %v645
    %v702 = vsel %vm663, %v698, %v647
    %v703 = vsel %vm663, %v699, %v649
    %v704 = vld [vmem:[%s2] sm:$0xff]
    %v705 = vld [vmem:[%s2 + $0x8] sm:$0xff]
    %v706 = vld [vmem:[%s2 + $0x10] sm:$0xff]
    %v707 = vld [vmem:[%s2 + $0x18] sm:$0xff]
    %v708 = vld [vmem:[%s2 + $0x20] sm:$0xff]
    %v709 = vld [vmem:[%s2 + $0x28] sm:$0xff]
    %v710 = vld [vmem:[%s2 + $0x30] sm:$0xff]
    %v711 = vld [vmem:[%s2 + $0x38] sm:$0xff]
    %v712 = vld [vmem:[%s2 + $0x40] sm:$0xff]
    %v713 = vld [vmem:[%s2 + $0x48] sm:$0xff]
    %v714 = vld [vmem:[%s2 + $0x50] sm:$0xff]
    %v715 = vld [vmem:[%s2 + $0x58] sm:$0xff]
    %v716 = vld [vmem:[%s2 + $0x60] sm:$0xff]
    %v717 = vld [vmem:[%s2 + $0x68] sm:$0xff]
    %v718 = vld [vmem:[%s2 + $0x70] sm:$0xff]
    %v719 = vld [vmem:[%s2 + $0x78] sm:$0xff]
    %v720 = vld [vmem:[%s2 + $0x80] sm:$0xff]
    %v721 = vld [vmem:[%s2 + $0x88] sm:$0xff]
    %v722 = vld [vmem:[%s2 + $0x90] sm:$0xff]
    %v723 = vld [vmem:[%s2 + $0x98] sm:$0xff]
    %v724 = vld [vmem:[%s2 + $0xa0] sm:$0xff]
    %v725 = vld [vmem:[%s2 + $0xa8] sm:$0xff]
    %v726 = vld [vmem:[%s2 + $0xb0] sm:$0xff]
    %v727 = vld [vmem:[%s2 + $0xb8] sm:$0xff]
    %v728 = vld [vmem:[%s2 + $0xc0] sm:$0xff]
    %v729 = vld [vmem:[%s2 + $0xc8] sm:$0xff]
    %v730 = vld [vmem:[%s2 + $0xd0] sm:$0xff]
    %v731 = vld [vmem:[%s2 + $0xd8] sm:$0xff]
    %v732 = vld [vmem:[%s2 + $0xe0] sm:$0xff]
    %v733 = vld [vmem:[%s2 + $0xe8] sm:$0xff]
    %v734 = vld [vmem:[%s2 + $0xf0] sm:$0xff]
    %v735 = vld [vmem:[%s2 + $0xf8] sm:$0xff]
    %v736 = vld [vmem:[%s2 + $0x100] sm:$0xff]
    %v737 = vld [vmem:[%s2 + $0x108] sm:$0xff]
    %v738 = vld [vmem:[%s2 + $0x110] sm:$0xff]
    %v739 = vld [vmem:[%s2 + $0x118] sm:$0xff]
    %v740 = vld [vmem:[%s2 + $0x120] sm:$0xff]
    %v741 = vld [vmem:[%s2 + $0x128] sm:$0xff]
    %v742 = vld [vmem:[%s2 + $0x130] sm:$0xff]
    %v743 = vld [vmem:[%s2 + $0x138] sm:$0xff]
    %v744 = vld [vmem:[%s2 + $0x140] sm:$0xff]
    %v745 = vld [vmem:[%s2 + $0x148] sm:$0xff]
    %v746 = vld [vmem:[%s2 + $0x150] sm:$0xff]
    %v747 = vld [vmem:[%s2 + $0x158] sm:$0xff]
    %v748 = vld [vmem:[%s2 + $0x160] sm:$0xff]
    %v749 = vld [vmem:[%s2 + $0x168] sm:$0xff]
    %v750 = vld [vmem:[%s2 + $0x170] sm:$0xff]
    %v751 = vld [vmem:[%s2 + $0x178] sm:$0xff]
    %v752 = vld [vmem:[%s2 + $0x180] sm:$0xff]
    %v753 = vld [vmem:[%s2 + $0x188] sm:$0xff]
    %v754 = vld [vmem:[%s2 + $0x190] sm:$0xff]
    %v755 = vld [vmem:[%s2 + $0x198] sm:$0xff]
    %v756 = vld [vmem:[%s2 + $0x1a0] sm:$0xff]
    %v757 = vld [vmem:[%s2 + $0x1a8] sm:$0xff]
    %v758 = vld [vmem:[%s2 + $0x1b0] sm:$0xff]
    %v759 = vld [vmem:[%s2 + $0x1b8] sm:$0xff]
    %v760 = vld [vmem:[%s2 + $0x1c0] sm:$0xff]
    %v761 = vld [vmem:[%s2 + $0x1c8] sm:$0xff]
    %v762 = vld [vmem:[%s2 + $0x1d0] sm:$0xff]
    %v763 = vld [vmem:[%s2 + $0x1d8] sm:$0xff]
    %v764 = vld [vmem:[%s2 + $0x1e0] sm:$0xff]
    %v765 = vld [vmem:[%s2 + $0x1e8] sm:$0xff]
    %v766 = vld [vmem:[%s2 + $0x1f0] sm:$0xff]
    %v767 = vld [vmem:[%s2 + $0x1f8] sm:$0xff]
    %v768 = vperm.slane %v33, 1
    %769 = vmatpush.msra.mxu0 %v719
    %770 = vmatpush.msra.mxu0 %v718
    %771 = vmatpush.msra.mxu0 %v717
    %772 = vmatpush.msra.mxu0 %v716
    %773 = vmatpush.msra.mxu0 %v715
    %774 = vmatpush.msra.mxu0 %v714
    %775 = vmatpush.msra.mxu0 %v713
    %776 = vmatpush.msra.mxu0 %v712
    %777 = vmatpush.msra.mxu0 %v711
    %778 = vmatpush.msra.mxu0 %v710
    %779 = vmatpush.msra.mxu0 %v709
    %780 = vmatpush.msra.mxu0 %v708
    %781 = vmatpush.msra.mxu0 %v707
    %782 = vmatpush.msra.mxu0 %v706
    %783 = vmatpush.msra.mxu0 %v705
    %784 = vmatpush.msra.mxu0 %v704
    %785 = vmatmul.f32.gmra.mxu0 %v664
    %v786 = vpop.f32.mrf.mxu0
    %v787 = vadd.f32 %v768, %v786
    %788 = vmatmul.f32.gmra.mxu0 %v665
    %v789 = vpop.f32.mrf.mxu0
    %v790 = vadd.f32 %v768, %v789
    %791 = vmatmul.f32.gmra.mxu0 %v666
    %v792 = vpop.f32.mrf.mxu0
    %v793 = vadd.f32 %v768, %v792
    %794 = vmatmul.f32.gmra.mxu0 %v667
    %v795 = vpop.f32.mrf.mxu0
    %v796 = vadd.f32 %v768, %v795
    %797 = vdwg.mxu0
    %798 = vmatpush.msra.mxu0 %v735
    %799 = vmatpush.msra.mxu0 %v734
    %800 = vmatpush.msra.mxu0 %v733
    %801 = vmatpush.msra.mxu0 %v732
    %802 = vmatpush.msra.mxu0 %v731
    %803 = vmatpush.msra.mxu0 %v730
    %804 = vmatpush.msra.mxu0 %v729
    %805 = vmatpush.msra.mxu0 %v728
    %806 = vmatpush.msra.mxu0 %v727
    %807 = vmatpush.msra.mxu0 %v726
    %808 = vmatpush.msra.mxu0 %v725
    %809 = vmatpush.msra.mxu0 %v724
    %810 = vmatpush.msra.mxu0 %v723
    %811 = vmatpush.msra.mxu0 %v722
    %812 = vmatpush.msra.mxu0 %v721
    %813 = vmatpush.msra.mxu0 %v720
    %814 = vmatmul.f32.gmra.mxu0 %v676
    %v815 = vpop.f32.mrf.mxu0
    %v816 = vadd.f32 %v787, %v815
    %817 = vmatmul.f32.gmra.mxu0 %v677
    %v818 = vpop.f32.mrf.mxu0
    %v819 = vadd.f32 %v790, %v818
    %820 = vmatmul.f32.gmra.mxu0 %v678
    %v821 = vpop.f32.mrf.mxu0
    %v822 = vadd.f32 %v793, %v821
    %823 = vmatmul.f32.gmra.mxu0 %v679
    %v824 = vpop.f32.mrf.mxu0
    %v825 = vadd.f32 %v796, %v824
    %826 = vdwg.mxu0
    %827 = vmatpush.msra.mxu0 %v751
    %828 = vmatpush.msra.mxu0 %v750
    %829 = vmatpush.msra.mxu0 %v749
    %830 = vmatpush.msra.mxu0 %v748
    %831 = vmatpush.msra.mxu0 %v747
    %832 = vmatpush.msra.mxu0 %v746
    %833 = vmatpush.msra.mxu0 %v745
    %834 = vmatpush.msra.mxu0 %v744
    %835 = vmatpush.msra.mxu0 %v743
    %836 = vmatpush.msra.mxu0 %v742
    %837 = vmatpush.msra.mxu0 %v741
    %838 = vmatpush.msra.mxu0 %v740
    %839 = vmatpush.msra.mxu0 %v739
    %840 = vmatpush.msra.mxu0 %v738
    %841 = vmatpush.msra.mxu0 %v737
    %842 = vmatpush.msra.mxu0 %v736
    %843 = vmatmul.f32.gmra.mxu0 %v688
    %v844 = vpop.f32.mrf.mxu0
    %v845 = vadd.f32 %v816, %v844
    %846 = vmatmul.f32.gmra.mxu0 %v689
    %v847 = vpop.f32.mrf.mxu0
    %v848 = vadd.f32 %v819, %v847
    %849 = vmatmul.f32.gmra.mxu0 %v690
    %v850 = vpop.f32.mrf.mxu0
    %v851 = vadd.f32 %v822, %v850
    %852 = vmatmul.f32.gmra.mxu0 %v691
    %v853 = vpop.f32.mrf.mxu0
    %v854 = vadd.f32 %v825, %v853
    %855 = vdwg.mxu0
    %856 = vmatpush.msra.mxu0 %v767
    %857 = vmatpush.msra.mxu0 %v766
    %858 = vmatpush.msra.mxu0 %v765
    %859 = vmatpush.msra.mxu0 %v764
    %860 = vmatpush.msra.mxu0 %v763
    %861 = vmatpush.msra.mxu0 %v762
    %862 = vmatpush.msra.mxu0 %v761
    %863 = vmatpush.msra.mxu0 %v760
    %864 = vmatpush.msra.mxu0 %v759
    %865 = vmatpush.msra.mxu0 %v758
    %866 = vmatpush.msra.mxu0 %v757
    %867 = vmatpush.msra.mxu0 %v756
    %868 = vmatpush.msra.mxu0 %v755
    %869 = vmatpush.msra.mxu0 %v754
    %870 = vmatpush.msra.mxu0 %v753
    %871 = vmatpush.msra.mxu0 %v752
    %872 = vmatmul.f32.gmra.mxu0 %v700
    %v873 = vpop.f32.mrf.mxu0
    %v874 = vadd.f32 %v845, %v873
    %875 = vmatmul.f32.gmra.mxu0 %v701
    %v876 = vpop.f32.mrf.mxu0
    %v877 = vadd.f32 %v848, %v876
    %878 = vmatmul.f32.gmra.mxu0 %v702
    %v879 = vpop.f32.mrf.mxu0
    %v880 = vadd.f32 %v851, %v879
    %881 = vmatmul.f32.gmra.mxu0 %v703
    %v882 = vpop.f32.mrf.mxu0
    %v883 = vadd.f32 %v854, %v882
    %884 = vdwg.mxu0
    %v885 = vmax.f32 %v874, 0.0
    %v886 = vmax.f32 %v877, 0.0
    %v887 = vmax.f32 %v880, 0.0
    %v888 = vmax.f32 %v883, 0.0
    %v889 = vld [vmem:[%s7] sm:$0xff]
    %v890 = vld [vmem:[%s7 + $0x8] sm:$0xff]
    %v891 = vld [vmem:[%s7 + $0x10] sm:$0xff]
    %v892 = vld [vmem:[%s7 + $0x18] sm:$0xff]
    %v893 = vld [vmem:[%s7 + $0x20] sm:$0xff]
    %v894 = vld [vmem:[%s7 + $0x28] sm:$0xff]
    %v895 = vld [vmem:[%s7 + $0x30] sm:$0xff]
    %v896 = vld [vmem:[%s7 + $0x38] sm:$0xff]
    %v897 = vld [vmem:[%s7 + $0x40] sm:$0xff]
    %v898 = vld [vmem:[%s7 + $0x48] sm:$0xff]
    %v899 = vld [vmem:[%s7 + $0x50] sm:$0xff]
    %v900 = vld [vmem:[%s7 + $0x58] sm:$0xff]
    %v901 = vld [vmem:[%s7 + $0x60] sm:$0xff]
    %v902 = vld [vmem:[%s7 + $0x68] sm:$0xff]
    %v903 = vld [vmem:[%s7 + $0x70] sm:$0xff]
    %v904 = vld [vmem:[%s7 + $0x78] sm:$0xff]
    %v906 = vsel %vm654, %v889, 0
    %v909 = vsel %vm654, %v890, 0
    %v912 = vsel %vm654, %v891, 0
    %v915 = vsel %vm654, %v892, 0
    %v918 = vsel %vm654, %v893, 0
    %v921 = vsel %vm654, %v894, 0
    %v924 = vsel %vm654, %v895, 0
    %v927 = vsel %vm654, %v896, 0
    %v930 = vsel %vm654, %v897, 0
    %v933 = vsel %vm654, %v898, 0
    %v936 = vsel %vm654, %v899, 0
    %v939 = vsel %vm654, %v900, 0
    %v942 = vsel %vm654, %v901, 0
    %v945 = vsel %vm654, %v902, 0
    %v948 = vsel %vm654, %v903, 0
    %v951 = vsel %vm654, %v904, 0
    %953 = vmatpush.msra.mxu0 0.0
    %954 = vmatpush.msra.mxu0 0.0
    %955 = vmatpush.msra.mxu0 0.0
    %956 = vmatpush.msra.mxu0 0.0
    %957 = vmatpush.msra.mxu0 0.0
    %958 = vmatpush.msra.mxu0 0.0
    %959 = vmatpush.msra.mxu0 0.0
    %960 = vmatpush.msra.mxu0 0.0
    %961 = vmatpush.msra.mxu0 0.0
    %962 = vmatpush.msra.mxu0 0.0
    %963 = vmatpush.msra.mxu0 0.0
    %964 = vmatpush.msra.mxu0 0.0
    %965 = vmatpush.msra.mxu0 %v888
    %966 = vmatpush.msra.mxu0 %v887
    %967 = vmatpush.msra.mxu0 %v886
    %968 = vmatpush.msra.mxu0 %v885
    %969 = vmatmul.f32.gmra.mxu0 %v906
    %v970 = vpop.f32.mrf.mxu0
    %v971 = vadd.f32 0.0, %v970
    %972 = vmatmul.f32.gmra.mxu0 %v909
    %v973 = vpop.f32.mrf.mxu0
    %v974 = vadd.f32 0.0, %v973
    %975 = vmatmul.f32.gmra.mxu0 %v912
    %v976 = vpop.f32.mrf.mxu0
    %v977 = vadd.f32 0.0, %v976
    %978 = vmatmul.f32.gmra.mxu0 %v915
    %v979 = vpop.f32.mrf.mxu0
    %v980 = vadd.f32 0.0, %v979
    %981 = vmatmul.f32.gmra.mxu0 %v918
    %v982 = vpop.f32.mrf.mxu0
    %v983 = vadd.f32 0.0, %v982
    %984 = vmatmul.f32.gmra.mxu0 %v921
    %v985 = vpop.f32.mrf.mxu0
    %v986 = vadd.f32 0.0, %v985
    %987 = vmatmul.f32.gmra.mxu0 %v924
    %v988 = vpop.f32.mrf.mxu0
    %v989 = vadd.f32 0.0, %v988
    %990 = vmatmul.f32.gmra.mxu0 %v927
    %v991 = vpop.f32.mrf.mxu0
    %v992 = vadd.f32 0.0, %v991
    %993 = vmatmul.f32.gmra.mxu0 %v930
    %v994 = vpop.f32.mrf.mxu0
    %v995 = vadd.f32 0.0, %v994
    %996 = vmatmul.f32.gmra.mxu0 %v933
    %v997 = vpop.f32.mrf.mxu0
    %v998 = vadd.f32 0.0, %v997
    %999 = vmatmul.f32.gmra.mxu0 %v936
    %v1000 = vpop.f32.mrf.mxu0
    %v1001 = vadd.f32 0.0, %v1000
    %1002 = vmatmul.f32.gmra.mxu0 %v939
    %v1003 = vpop.f32.mrf.mxu0
    %v1004 = vadd.f32 0.0, %v1003
    %1005 = vmatmul.f32.gmra.mxu0 %v942
    %v1006 = vpop.f32.mrf.mxu0
    %v1007 = vadd.f32 0.0, %v1006
    %1008 = vmatmul.f32.gmra.mxu0 %v945
    %v1009 = vpop.f32.mrf.mxu0
    %v1010 = vadd.f32 0.0, %v1009
    %1011 = vmatmul.f32.gmra.mxu0 %v948
    %v1012 = vpop.f32.mrf.mxu0
    %v1013 = vadd.f32 0.0, %v1012
    %1014 = vmatmul.f32.gmra.mxu0 %v951
    %v1015 = vpop.f32.mrf.mxu0
    %v1016 = vadd.f32 0.0, %v1015
    %1017 = vdwg.mxu0
    %1019 = vrot.lane.b32.xlu0 %v974, 32
    %v1020 = vpop.permute.xlu0 %1019
    %1023 = vrot.lane.b32.xlu0 %v977, 64
    %v1024 = vpop.permute.xlu0 %1023
    %1027 = vrot.lane.b32.xlu0 %v980, 96
    %v1028 = vpop.permute.xlu0 %1027
    %1031 = vrot.lane.b32.xlu0 %v986, 32
    %v1032 = vpop.permute.xlu0 %1031
    %1035 = vrot.lane.b32.xlu0 %v989, 64
    %v1036 = vpop.permute.xlu0 %1035
    %1039 = vrot.lane.b32.xlu0 %v992, 96
    %v1040 = vpop.permute.xlu0 %1039
    %1043 = vrot.lane.b32.xlu0 %v998, 32
    %v1044 = vpop.permute.xlu0 %1043
    %1047 = vrot.lane.b32.xlu0 %v1001, 64
    %v1048 = vpop.permute.xlu0 %1047
    %1051 = vrot.lane.b32.xlu0 %v1004, 96
    %v1052 = vpop.permute.xlu0 %1051
    %1055 = vrot.lane.b32.xlu0 %v1010, 32
    %v1056 = vpop.permute.xlu0 %1055
    %1059 = vrot.lane.b32.xlu0 %v1013, 64
    %v1060 = vpop.permute.xlu0 %1059
    %1063 = vrot.lane.b32.xlu0 %v1016, 96
    %v1064 = vpop.permute.xlu0 %1063
    %v1066 = vsel %vm654, %v971, %v1020
    %v1067 = vsel %vm59, %v1066, %v1024
    %v1068 = vsel %vm663, %v1067, %v1028
    %v1069 = vsel %vm654, %v983, %v1032
    %v1070 = vsel %vm59, %v1069, %v1036
    %v1071 = vsel %vm663, %v1070, %v1040
    %v1072 = vsel %vm654, %v995, %v1044
    %v1073 = vsel %vm59, %v1072, %v1048
    %v1074 = vsel %vm663, %v1073, %v1052
    %v1075 = vsel %vm654, %v1007, %v1056
    %v1076 = vsel %vm59, %v1075, %v1060
    %v1077 = vsel %vm663, %v1076, %v1064
    %v1078 = vld [vmem:[%s3] sm:$0xff]
    %v1079 = vld [vmem:[%s3 + $0x8] sm:$0xff]
    %v1080 = vld [vmem:[%s3 + $0x10] sm:$0xff]
    %v1081 = vld [vmem:[%s3 + $0x18] sm:$0xff]
    %v1082 = vld [vmem:[%s3 + $0x20] sm:$0xff]
    %v1083 = vld [vmem:[%s3 + $0x28] sm:$0xff]
    %v1084 = vld [vmem:[%s3 + $0x30] sm:$0xff]
    %v1085 = vld [vmem:[%s3 + $0x38] sm:$0xff]
    %v1086 = vld [vmem:[%s3 + $0x40] sm:$0xff]
    %v1087 = vld [vmem:[%s3 + $0x48] sm:$0xff]
    %v1088 = vld [vmem:[%s3 + $0x50] sm:$0xff]
    %v1089 = vld [vmem:[%s3 + $0x58] sm:$0xff]
    %v1090 = vld [vmem:[%s3 + $0x60] sm:$0xff]
    %v1091 = vld [vmem:[%s3 + $0x68] sm:$0xff]
    %v1092 = vld [vmem:[%s3 + $0x70] sm:$0xff]
    %v1093 = vld [vmem:[%s3 + $0x78] sm:$0xff]
    %v1094 = vld [vmem:[%s3 + $0x80] sm:$0xff]
    %v1095 = vld [vmem:[%s3 + $0x88] sm:$0xff]
    %v1096 = vld [vmem:[%s3 + $0x90] sm:$0xff]
    %v1097 = vld [vmem:[%s3 + $0x98] sm:$0xff]
    %v1098 = vld [vmem:[%s3 + $0xa0] sm:$0xff]
    %v1099 = vld [vmem:[%s3 + $0xa8] sm:$0xff]
    %v1100 = vld [vmem:[%s3 + $0xb0] sm:$0xff]
    %v1101 = vld [vmem:[%s3 + $0xb8] sm:$0xff]
    %v1102 = vld [vmem:[%s3 + $0xc0] sm:$0xff]
    %v1103 = vld [vmem:[%s3 + $0xc8] sm:$0xff]
    %v1104 = vld [vmem:[%s3 + $0xd0] sm:$0xff]
    %v1105 = vld [vmem:[%s3 + $0xd8] sm:$0xff]
    %v1106 = vld [vmem:[%s3 + $0xe0] sm:$0xff]
    %v1107 = vld [vmem:[%s3 + $0xe8] sm:$0xff]
    %v1108 = vld [vmem:[%s3 + $0xf0] sm:$0xff]
    %v1109 = vld [vmem:[%s3 + $0xf8] sm:$0xff]
    %v1110 = vld [vmem:[%s3 + $0x100] sm:$0xff]
    %v1111 = vld [vmem:[%s3 + $0x108] sm:$0xff]
    %v1112 = vld [vmem:[%s3 + $0x110] sm:$0xff]
    %v1113 = vld [vmem:[%s3 + $0x118] sm:$0xff]
    %v1114 = vld [vmem:[%s3 + $0x120] sm:$0xff]
    %v1115 = vld [vmem:[%s3 + $0x128] sm:$0xff]
    %v1116 = vld [vmem:[%s3 + $0x130] sm:$0xff]
    %v1117 = vld [vmem:[%s3 + $0x138] sm:$0xff]
    %v1118 = vld [vmem:[%s3 + $0x140] sm:$0xff]
    %v1119 = vld [vmem:[%s3 + $0x148] sm:$0xff]
    %v1120 = vld [vmem:[%s3 + $0x150] sm:$0xff]
    %v1121 = vld [vmem:[%s3 + $0x158] sm:$0xff]
    %v1122 = vld [vmem:[%s3 + $0x160] sm:$0xff]
    %v1123 = vld [vmem:[%s3 + $0x168] sm:$0xff]
    %v1124 = vld [vmem:[%s3 + $0x170] sm:$0xff]
    %v1125 = vld [vmem:[%s3 + $0x178] sm:$0xff]
    %v1126 = vld [vmem:[%s3 + $0x180] sm:$0xff]
    %v1127 = vld [vmem:[%s3 + $0x188] sm:$0xff]
    %v1128 = vld [vmem:[%s3 + $0x190] sm:$0xff]
    %v1129 = vld [vmem:[%s3 + $0x198] sm:$0xff]
    %v1130 = vld [vmem:[%s3 + $0x1a0] sm:$0xff]
    %v1131 = vld [vmem:[%s3 + $0x1a8] sm:$0xff]
    %v1132 = vld [vmem:[%s3 + $0x1b0] sm:$0xff]
    %v1133 = vld [vmem:[%s3 + $0x1b8] sm:$0xff]
    %v1134 = vld [vmem:[%s3 + $0x1c0] sm:$0xff]
    %v1135 = vld [vmem:[%s3 + $0x1c8] sm:$0xff]
    %v1136 = vld [vmem:[%s3 + $0x1d0] sm:$0xff]
    %v1137 = vld [vmem:[%s3 + $0x1d8] sm:$0xff]
    %v1138 = vld [vmem:[%s3 + $0x1e0] sm:$0xff]
    %v1139 = vld [vmem:[%s3 + $0x1e8] sm:$0xff]
    %v1140 = vld [vmem:[%s3 + $0x1f0] sm:$0xff]
    %v1141 = vld [vmem:[%s3 + $0x1f8] sm:$0xff]
    %v1142 = vperm.slane %v33, 2
    %1143 = vmatpush.msra.mxu0 %v1093
    %1144 = vmatpush.msra.mxu0 %v1092
    %1145 = vmatpush.msra.mxu0 %v1091
    %1146 = vmatpush.msra.mxu0 %v1090
    %1147 = vmatpush.msra.mxu0 %v1089
    %1148 = vmatpush.msra.mxu0 %v1088
    %1149 = vmatpush.msra.mxu0 %v1087
    %1150 = vmatpush.msra.mxu0 %v1086
    %1151 = vmatpush.msra.mxu0 %v1085
    %1152 = vmatpush.msra.mxu0 %v1084
    %1153 = vmatpush.msra.mxu0 %v1083
    %1154 = vmatpush.msra.mxu0 %v1082
    %1155 = vmatpush.msra.mxu0 %v1081
    %1156 = vmatpush.msra.mxu0 %v1080
    %1157 = vmatpush.msra.mxu0 %v1079
    %1158 = vmatpush.msra.mxu0 %v1078
    %1159 = vmatmul.f32.gmra.mxu0 %v1068
    %v1160 = vpop.f32.mrf.mxu0
    %v1161 = vadd.f32 %v1142, %v1160
    %1162 = vdwg.mxu0
    %1163 = vmatpush.msra.mxu0 %v1109
    %1164 = vmatpush.msra.mxu0 %v1108
    %1165 = vmatpush.msra.mxu0 %v1107
    %1166 = vmatpush.msra.mxu0 %v1106
    %1167 = vmatpush.msra.mxu0 %v1105
    %1168 = vmatpush.msra.mxu0 %v1104
    %1169 = vmatpush.msra.mxu0 %v1103
    %1170 = vmatpush.msra.mxu0 %v1102
    %1171 = vmatpush.msra.mxu0 %v1101
    %1172 = vmatpush.msra.mxu0 %v1100
    %1173 = vmatpush.msra.mxu0 %v1099
    %1174 = vmatpush.msra.mxu0 %v1098
    %1175 = vmatpush.msra.mxu0 %v1097
    %1176 = vmatpush.msra.mxu0 %v1096
    %1177 = vmatpush.msra.mxu0 %v1095
    %1178 = vmatpush.msra.mxu0 %v1094
    %1179 = vmatmul.f32.gmra.mxu0 %v1071
    %v1180 = vpop.f32.mrf.mxu0
    %v1181 = vadd.f32 %v1161, %v1180
    %1182 = vdwg.mxu0
    %1183 = vmatpush.msra.mxu0 %v1125
    %1184 = vmatpush.msra.mxu0 %v1124
    %1185 = vmatpush.msra.mxu0 %v1123
    %1186 = vmatpush.msra.mxu0 %v1122
    %1187 = vmatpush.msra.mxu0 %v1121
    %1188 = vmatpush.msra.mxu0 %v1120
    %1189 = vmatpush.msra.mxu0 %v1119
    %1190 = vmatpush.msra.mxu0 %v1118
    %1191 = vmatpush.msra.mxu0 %v1117
    %1192 = vmatpush.msra.mxu0 %v1116
    %1193 = vmatpush.msra.mxu0 %v1115
    %1194 = vmatpush.msra.mxu0 %v1114
    %1195 = vmatpush.msra.mxu0 %v1113
    %1196 = vmatpush.msra.mxu0 %v1112
    %1197 = vmatpush.msra.mxu0 %v1111
    %1198 = vmatpush.msra.mxu0 %v1110
    %1199 = vmatmul.f32.gmra.mxu0 %v1074
    %v1200 = vpop.f32.mrf.mxu0
    %v1201 = vadd.f32 %v1181, %v1200
    %1202 = vdwg.mxu0
    %1203 = vmatpush.msra.mxu0 %v1141
    %1204 = vmatpush.msra.mxu0 %v1140
    %1205 = vmatpush.msra.mxu0 %v1139
    %1206 = vmatpush.msra.mxu0 %v1138
    %1207 = vmatpush.msra.mxu0 %v1137
    %1208 = vmatpush.msra.mxu0 %v1136
    %1209 = vmatpush.msra.mxu0 %v1135
    %1210 = vmatpush.msra.mxu0 %v1134
    %1211 = vmatpush.msra.mxu0 %v1133
    %1212 = vmatpush.msra.mxu0 %v1132
    %1213 = vmatpush.msra.mxu0 %v1131
    %1214 = vmatpush.msra.mxu0 %v1130
    %1215 = vmatpush.msra.mxu0 %v1129
    %1216 = vmatpush.msra.mxu0 %v1128
    %1217 = vmatpush.msra.mxu0 %v1127
    %1218 = vmatpush.msra.mxu0 %v1126
    %1219 = vmatmul.f32.gmra.mxu0 %v1077
    %v1220 = vpop.f32.mrf.mxu0
    %v1221 = vadd.f32 %v1201, %v1220
    %1222 = vdwg.mxu0
    %v1223 = vmax.f32 %v1221, 0.0
    %v1224 = vld [vmem:[%s8] sm:$0xff]
    %v1225 = vld [vmem:[%s8 + $0x8] sm:$0xff]
    %v1226 = vld [vmem:[%s8 + $0x10] sm:$0xff]
    %v1227 = vld [vmem:[%s8 + $0x18] sm:$0xff]
    %v1228 = vld [vmem:[%s8 + $0x20] sm:$0xff]
    %v1229 = vld [vmem:[%s8 + $0x28] sm:$0xff]
    %v1230 = vld [vmem:[%s8 + $0x30] sm:$0xff]
    %v1231 = vld [vmem:[%s8 + $0x38] sm:$0xff]
    %v1232 = vld [vmem:[%s8 + $0x40] sm:$0xff]
    %vm1233 = vcmask 64512
    %v1235 = vsel %vm1233, %v1224, 0
    %v1238 = vsel %vm1233, %v1225, 0
    %v1241 = vsel %vm1233, %v1226, 0
    %v1244 = vsel %vm1233, %v1227, 0
    %v1247 = vsel %vm1233, %v1228, 0
    %v1250 = vsel %vm1233, %v1229, 0
    %v1253 = vsel %vm1233, %v1230, 0
    %v1256 = vsel %vm1233, %v1231, 0
    %v1259 = vsel %vm1233, %v1232, 0
    %1261 = vmatpush.msra.mxu0 0.0
    %1262 = vmatpush.msra.mxu0 0.0
    %1263 = vmatpush.msra.mxu0 0.0
    %1264 = vmatpush.msra.mxu0 0.0
    %1265 = vmatpush.msra.mxu0 0.0
    %1266 = vmatpush.msra.mxu0 0.0
    %1267 = vmatpush.msra.mxu0 0.0
    %1268 = vmatpush.msra.mxu0 0.0
    %1269 = vmatpush.msra.mxu0 0.0
    %1270 = vmatpush.msra.mxu0 0.0
    %1271 = vmatpush.msra.mxu0 0.0
    %1272 = vmatpush.msra.mxu0 0.0
    %1273 = vmatpush.msra.mxu0 0.0
    %1274 = vmatpush.msra.mxu0 0.0
    %1275 = vmatpush.msra.mxu0 0.0
    %1276 = vmatpush.msra.mxu0 %v1223
    %1277 = vmatmul.f32.gmra.mxu0 %v1235
    %v1278 = vpop.f32.mrf.mxu0
    %v1279 = vadd.f32 0.0, %v1278
    %1280 = vmatmul.f32.gmra.mxu0 %v1238
    %v1281 = vpop.f32.mrf.mxu0
    %v1282 = vadd.f32 0.0, %v1281
    %1283 = vmatmul.f32.gmra.mxu0 %v1241
    %v1284 = vpop.f32.mrf.mxu0
    %v1285 = vadd.f32 0.0, %v1284
    %1286 = vmatmul.f32.gmra.mxu0 %v1244
    %v1287 = vpop.f32.mrf.mxu0
    %v1288 = vadd.f32 0.0, %v1287
    %1289 = vmatmul.f32.gmra.mxu0 %v1247
    %v1290 = vpop.f32.mrf.mxu0
    %v1291 = vadd.f32 0.0, %v1290
    %1292 = vmatmul.f32.gmra.mxu0 %v1250
    %v1293 = vpop.f32.mrf.mxu0
    %v1294 = vadd.f32 0.0, %v1293
    %1295 = vmatmul.f32.gmra.mxu0 %v1253
    %v1296 = vpop.f32.mrf.mxu0
    %v1297 = vadd.f32 0.0, %v1296
    %1298 = vmatmul.f32.gmra.mxu0 %v1256
    %v1299 = vpop.f32.mrf.mxu0
    %v1300 = vadd.f32 0.0, %v1299
    %1301 = vmatmul.f32.gmra.mxu0 %v1259
    %v1302 = vpop.f32.mrf.mxu0
    %v1303 = vadd.f32 0.0, %v1302
    %1304 = vdwg.mxu0
    %1306 = vrot.lane.b32.xlu0 %v1282, 32
    %v1307 = vpop.permute.xlu0 %1306
    %1310 = vrot.lane.b32.xlu0 %v1285, 64
    %v1311 = vpop.permute.xlu0 %1310
    %1314 = vrot.lane.b32.xlu0 %v1288, 96
    %v1315 = vpop.permute.xlu0 %1314
    %1318 = vrot.lane.b32.xlu0 %v1294, 32
    %v1319 = vpop.permute.xlu0 %1318
    %1322 = vrot.lane.b32.xlu0 %v1297, 64
    %v1323 = vpop.permute.xlu0 %1322
    %1326 = vrot.lane.b32.xlu0 %v1300, 96
    %v1327 = vpop.permute.xlu0 %1326
    %v1329 = vsel %vm654, %v1279, %v1307
    %v1330 = vsel %vm59, %v1329, %v1311
    %v1331 = vsel %vm663, %v1330, %v1315
    %v1332 = vsel %vm654, %v1291, %v1319
    %v1333 = vsel %vm59, %v1332, %v1323
    %v1334 = vsel %vm663, %v1333, %v1327
    %v1335 = vld [vmem:[%s4] sm:$0xff]
    %v1336 = vld [vmem:[%s4 + $0x8] sm:$0xff]
    %v1337 = vld [vmem:[%s4 + $0x10] sm:$0xff]
    %v1338 = vld [vmem:[%s4 + $0x18] sm:$0xff]
    %v1339 = vld [vmem:[%s4 + $0x20] sm:$0xff]
    %v1340 = vld [vmem:[%s4 + $0x28] sm:$0xff]
    %v1341 = vld [vmem:[%s4 + $0x30] sm:$0xff]
    %v1342 = vld [vmem:[%s4 + $0x38] sm:$0xff]
    %v1343 = vld [vmem:[%s4 + $0x40] sm:$0xff]
    %v1344 = vld [vmem:[%s4 + $0x48] sm:$0xff]
    %v1345 = vld [vmem:[%s4 + $0x50] sm:$0xff]
    %v1346 = vld [vmem:[%s4 + $0x58] sm:$0xff]
    %v1347 = vld [vmem:[%s4 + $0x60] sm:$0xff]
    %v1348 = vld [vmem:[%s4 + $0x68] sm:$0xff]
    %v1349 = vld [vmem:[%s4 + $0x70] sm:$0xff]
    %v1350 = vld [vmem:[%s4 + $0x78] sm:$0xff]
    %v1351 = vld [vmem:[%s4 + $0x80] sm:$0xff]
    %v1352 = vld [vmem:[%s4 + $0x88] sm:$0xff]
    %v1353 = vld [vmem:[%s4 + $0x90] sm:$0xff]
    %v1354 = vld [vmem:[%s4 + $0x98] sm:$0xff]
    %v1355 = vld [vmem:[%s4 + $0xa0] sm:$0xff]
    %v1356 = vld [vmem:[%s4 + $0xa8] sm:$0xff]
    %v1357 = vld [vmem:[%s4 + $0xb0] sm:$0xff]
    %v1358 = vld [vmem:[%s4 + $0xb8] sm:$0xff]
    %v1359 = vld [vmem:[%s4 + $0xc0] sm:$0xff]
    %v1360 = vld [vmem:[%s4 + $0xc8] sm:$0xff]
    %v1361 = vld [vmem:[%s4 + $0xd0] sm:$0xff]
    %v1362 = vld [vmem:[%s4 + $0xd8] sm:$0xff]
    %v1363 = vld [vmem:[%s4 + $0xe0] sm:$0xff]
    %v1364 = vld [vmem:[%s4 + $0xe8] sm:$0xff]
    %v1365 = vld [vmem:[%s4 + $0xf0] sm:$0xff]
    %v1366 = vld [vmem:[%s4 + $0xf8] sm:$0xff]
    %v1367 = vld [vmem:[%s4 + $0x100] sm:$0xff]
    %v1368 = vld [vmem:[%s4 + $0x108] sm:$0xff]
    %v1369 = vld [vmem:[%s4 + $0x110] sm:$0xff]
    %v1370 = vld [vmem:[%s4 + $0x118] sm:$0xff]
    %v1371 = vperm.slane %v33, 3
    %v1373 = vsel %vm654, %v1303, 0
    %1375 = vmatpush.msra.mxu0 %v1350
    %1376 = vmatpush.msra.mxu0 %v1349
    %1377 = vmatpush.msra.mxu0 %v1348
    %1378 = vmatpush.msra.mxu0 %v1347
    %1379 = vmatpush.msra.mxu0 %v1346
    %1380 = vmatpush.msra.mxu0 %v1345
    %1381 = vmatpush.msra.mxu0 %v1344
    %1382 = vmatpush.msra.mxu0 %v1343
    %1383 = vmatpush.msra.mxu0 %v1342
    %1384 = vmatpush.msra.mxu0 %v1341
    %1385 = vmatpush.msra.mxu0 %v1340
    %1386 = vmatpush.msra.mxu0 %v1339
    %1387 = vmatpush.msra.mxu0 %v1338
    %1388 = vmatpush.msra.mxu0 %v1337
    %1389 = vmatpush.msra.mxu0 %v1336
    %1390 = vmatpush.msra.mxu0 %v1335
    %1391 = vmatmul.f32.gmra.mxu0 %v1331
    %v1392 = vpop.f32.mrf.mxu0
    %v1393 = vadd.f32 %v1371, %v1392
    %1394 = vdwg.mxu0
    %1395 = vmatpush.msra.mxu0 %v1366
    %1396 = vmatpush.msra.mxu0 %v1365
    %1397 = vmatpush.msra.mxu0 %v1364
    %1398 = vmatpush.msra.mxu0 %v1363
    %1399 = vmatpush.msra.mxu0 %v1362
    %1400 = vmatpush.msra.mxu0 %v1361
    %1401 = vmatpush.msra.mxu0 %v1360
    %1402 = vmatpush.msra.mxu0 %v1359
    %1403 = vmatpush.msra.mxu0 %v1358
    %1404 = vmatpush.msra.mxu0 %v1357
    %1405 = vmatpush.msra.mxu0 %v1356
    %1406 = vmatpush.msra.mxu0 %v1355
    %1407 = vmatpush.msra.mxu0 %v1354
    %1408 = vmatpush.msra.mxu0 %v1353
    %1409 = vmatpush.msra.mxu0 %v1352
    %1410 = vmatpush.msra.mxu0 %v1351
    %1411 = vmatmul.f32.gmra.mxu0 %v1334
    %v1412 = vpop.f32.mrf.mxu0
    %v1413 = vadd.f32 %v1393, %v1412
    %1414 = vdwg.mxu0
    %1415 = vmatpush.msra.mxu0 0.0
    %1416 = vmatpush.msra.mxu0 0.0
    %1417 = vmatpush.msra.mxu0 0.0
    %1418 = vmatpush.msra.mxu0 0.0
    %1419 = vmatpush.msra.mxu0 0.0
    %1420 = vmatpush.msra.mxu0 0.0
    %1421 = vmatpush.msra.mxu0 0.0
    %1422 = vmatpush.msra.mxu0 0.0
    %1423 = vmatpush.msra.mxu0 0.0
    %1424 = vmatpush.msra.mxu0 0.0
    %1425 = vmatpush.msra.mxu0 0.0
    %1426 = vmatpush.msra.mxu0 0.0
    %1427 = vmatpush.msra.mxu0 %v1370
    %1428 = vmatpush.msra.mxu0 %v1369
    %1429 = vmatpush.msra.mxu0 %v1368
    %1430 = vmatpush.msra.mxu0 %v1367
    %1431 = vmatmul.f32.gmra.mxu0 %v1373
    %v1432 = vpop.f32.mrf.mxu0
    %v1433 = vadd.f32 %v1413, %v1432
    %1434 = vdwg.mxu0
    %v1435 = vmax.f32 %v1433, 0.0
    %1436 = vst.msk [vmem:[#allocation2] sm:$0xff] %vm654, %v1435
    // Predicated region
    $region38: #{sgr_embedding_forward.1} parent=1 // pred_check
      _
    $region39: #{sgr_embedding_forward.1} parent=1 // pred_check_branch
      %1438 = sbr.rel (0) target = $region41
    $region40: #{sgr_embedding_forward.1} parent=1 // pred_region
      %1440 = vsyncadd [#allocation3], 0
      %s1442 = sshll.u32 [#allocation2], 4
      %s1443 = int_to_ptr.vmem [resolvable:$true] %s1442
      %s1444 = sshll.u32 %s9, 4
      %s1445 = int_to_ptr.hbm [resolvable:$true] %s1444
      %1447 = dma.vmem_to_hbm [thread:$0]  %s1443, 128, %s1445, [#allocation3]
    $region41: #{sgr_embedding_forward.1} parent=1 // pred_fallthru
      _
    // Predicated region
    $region42: #{sgr_embedding_forward.1} parent=1 // pred_check
      _
    $region43: #{sgr_embedding_forward.1} parent=1 // pred_check_branch
      %1449 = sbr.rel (0) target = $region45
    $region44: #{sgr_embedding_forward.1} parent=1 // pred_region
      %1451 = dma.done [#allocation3], 128
    $region45: #{sgr_embedding_forward.1} parent=1 // pred_fallthru
      _
    %1452 = vsyncpa [#allocation3], 1

</llo_original>
